<compile_context>
chip_gen: v6e
topology: v6e:2x2x1
jax: 0.10.0
libtpu: 0.0.40
codegen_flags: <defaults>
</compile_context>

<pallas_src>
import functools

import jax
import jax.numpy as jnp
from jax.experimental import pallas as pl
from jax.experimental.pallas import tpu as pltpu


def _round_up(n, m):
    return -(-n // m) * m


def _ffn_kernel(x_ref, w1_ref, b1_ref, w2_ref, b2_ref, o_ref, acc_ref):
    # x_ref:  (tm, E)  bf16 token tile
    # w1_ref: (E, th)  bf16, b1_ref: (1, th) f32
    # w2_ref: (th, E)  bf16, b2_ref: (1, E)  f32
    # acc_ref: (tm, E) f32 accumulator (resident across the h axis)
    h_idx = pl.program_id(1)

    @pl.when(h_idx == 0)
    def _():
        # Seed the accumulator with the second bias (broadcast once per tile).
        acc_ref[...] = jnp.broadcast_to(
            b2_ref[...].astype(jnp.float32), acc_ref.shape)

    x = x_ref[...]
    # First linear (bf16 MXU matmul, f32 accumulation) + bias + ReLU.
    hid = jnp.dot(x, w1_ref[...], preferred_element_type=jnp.float32)
    hid = jnp.maximum(hid + b1_ref[...], 0.0)
    # Second linear: accumulate this hidden-chunk's contribution.
    acc_ref[...] += jnp.dot(hid.astype(w2_ref.dtype), w2_ref[...],
                            preferred_element_type=jnp.float32)

    @pl.when(h_idx == pl.num_programs(1) - 1)
    def _():
        o_ref[...] = acc_ref[...].astype(o_ref.dtype)


@functools.partial(jax.jit, static_argnames=("tm", "th"))
def feed_forward(x, w1, b1, w2, b2, *, tm=256, th=512):
    """x: (B, S, E). w1: (E, H), b1: (1, H) or (H,), w2: (H, E), b2: (1, E) or (E,)."""
    B, S, E = x.shape
    H = w1.shape[1]
    out_dtype = x.dtype
    compute_dtype = jnp.bfloat16

    M = B * S
    # Clamp tiles when the problem is smaller than the requested tile, keeping
    # MXU/lane alignment (multiples of 128).
    tm_eff = min(tm, _round_up(M, 128))
    th_eff = min(th, _round_up(H, 128))

    Mp = _round_up(M, tm_eff)
    Hp = _round_up(H, th_eff)
    Ep = _round_up(E, 128)

    # --- Pad & cast operands (zero padding is exact: padded hidden units see
    # zero W1 columns and zero b1, so ReLU(0)=0 and they contribute nothing). ---
    x2d = x.reshape(M, E)
    x_p = jnp.pad(x2d, ((0, Mp - M), (0, Ep - E))).astype(compute_dtype)
    w1_p = jnp.pad(w1, ((0, Ep - E), (0, Hp - H))).astype(compute_dtype)
    w2_p = jnp.pad(w2, ((0, Hp - H), (0, Ep - E))).astype(compute_dtype)
    b1_p = jnp.pad(b1.reshape(1, H), ((0, 0), (0, Hp - H))).astype(jnp.float32)
    b2_p = jnp.pad(b2.reshape(1, E), ((0, 0), (0, Ep - E))).astype(jnp.float32)

    grid = (Mp // tm_eff, Hp // th_eff)

    # --- VMEM budget (double-buffered inputs/outputs + f32 accumulator). ---
    itemsize_out = jnp.dtype(out_dtype).itemsize
    vmem_needed = (
        2 * tm_eff * Ep * 2          # x tiles (bf16)
        + 2 * Ep * th_eff * 2        # W1 tiles (bf16)
        + 2 * th_eff * Ep * 2        # W2 tiles (bf16)
        + 2 * 8 * th_eff * 4         # b1 (sublane-padded, f32)
        + 2 * 8 * Ep * 4             # b2 (sublane-padded, f32)
        + 2 * tm_eff * Ep * itemsize_out   # output tiles
        + tm_eff * Ep * 4            # accumulator scratch
    )
    vmem_limit = min(max(int(1.5 * vmem_needed), 16 << 20), 64 << 20)

    cost = pl.CostEstimate(
        flops=4 * Mp * Ep * Hp,          # two matmuls: 2*M*E*H each
        transcendentals=0,
        bytes_accessed=(Mp * Ep * 2 + Ep * Hp * 2 + Hp * Ep * 2
                        + Hp * 4 + Ep * 4 + Mp * Ep * itemsize_out),
    )

    out2d = pl.pallas_call(
        _ffn_kernel,
        out_shape=jax.ShapeDtypeStruct((Mp, Ep), out_dtype),
        grid_spec=pltpu.PrefetchScalarGridSpec(
            num_scalar_prefetch=0,
            grid=grid,
            in_specs=[
                pl.BlockSpec((tm_eff, Ep), lambda i, h: (i, 0)),   # x tile (resident across h)
                pl.BlockSpec((Ep, th_eff), lambda i, h: (0, h)),   # W1 h-slice
                pl.BlockSpec((1, th_eff), lambda i, h: (0, h)),    # b1 h-slice
                pl.BlockSpec((th_eff, Ep), lambda i, h: (h, 0)),   # W2 h-slice
                pl.BlockSpec((1, Ep), lambda i, h: (0, 0)),        # b2
            ],
            out_specs=pl.BlockSpec((tm_eff, Ep), lambda i, h: (i, 0)),
            scratch_shapes=[pltpu.VMEM((tm_eff, Ep), jnp.float32)],
        ),
        compiler_params=pltpu.CompilerParams(
            dimension_semantics=("parallel", "arbitrary"),
            vmem_limit_bytes=vmem_limit,
        ),
        cost_estimate=cost,
    )(x_p, w1_p, b1_p, w2_p, b2_p)

    return out2d[:M, :E].reshape(B, S, E)


def init_params(key, embed_dim, hidden_dim):
    """Deterministic synthetic init (PyTorch-Linear-like uniform ranges).

    Weights stored as (in, out) == transpose of PyTorch's (out, in); math is
    identical to nn.Linear's x @ W.T + b.
    """
    k1, k2, k3, k4 = jax.random.split(key, 4)
    bound1 = 1.0 / (embed_dim ** 0.5)
    bound2 = 1.0 / (hidden_dim ** 0.5)
    w1 = jax.random.uniform(k1, (embed_dim, hidden_dim), jnp.float32,
                            -bound1, bound1)
    b1 = jax.random.uniform(k2, (1, hidden_dim), jnp.float32, -bound1, bound1)
    w2 = jax.random.uniform(k3, (hidden_dim, embed_dim), jnp.float32,
                            -bound2, bound2)
    b2 = jax.random.uniform(k4, (1, embed_dim), jnp.float32, -bound2, bound2)
    return w1, b1, w2, b2


if __name__ == "__main__":
    # Small shapes consistent with the module's forward: (batch, seq, embed),
    # embed_dim = hidden_dim = 512 as in the spec.
    batch, seq = 2, 8
    embed_dim, hidden_dim = 512, 512

    key = jax.random.PRNGKey(0)
    kx, kp = jax.random.split(key)
    x = jax.random.normal(kx, (batch, seq, embed_dim), jnp.float32)
    w1, b1, w2, b2 = init_params(kp, embed_dim, hidden_dim)

    # th=256 so the hidden-dim reduction axis actually takes 2 grid steps.
    out = feed_forward(x, w1, b1, w2, b2, tm=256, th=256)
    out = jax.block_until_ready(out)

    # Reference in plain JAX (same math as nn.Sequential(Linear, ReLU, Linear)).
    ref = jnp.maximum(x.reshape(-1, embed_dim) @ w1 + b1, 0.0) @ w2 + b2
    ref = ref.reshape(batch, seq, embed_dim)

    assert out.shape == (batch, seq, embed_dim)
    # bf16 MXU matmuls with f32 accumulation -> loosen tolerance vs f32 ref.
    assert jnp.allclose(out, ref, atol=5e-2, rtol=5e-2), (
        float(jnp.max(jnp.abs(out - ref))))

    print("KERNEL_OK")
</pallas_src>

<mosaic_0001>
module attributes {stable_mosaic.version = 11 : i64} {
  func.func @_ffn_kernel(%arg0: i32, %arg1: i32, %arg2: memref<128x512xbf16, #tpu.memory_space<vmem>>, %arg3: memref<512x256xbf16, #tpu.memory_space<vmem>>, %arg4: memref<1x256xf32, #tpu.memory_space<vmem>>, %arg5: memref<256x512xbf16, #tpu.memory_space<vmem>>, %arg6: memref<1x512xf32, #tpu.memory_space<vmem>>, %arg7: memref<128x512xf32, #tpu.memory_space<vmem>>, %arg8: memref<128x512xf32, #tpu.memory_space<vmem>>) attributes {dimension_semantics = [#tpu.dimension_semantics<parallel>, #tpu.dimension_semantics<arbitrary>], iteration_bounds = array<i64: 1, 2>, scalar_prefetch = 0 : i64, scratch_operands = 1 : i64, tpu.core_type = #tpu.core_type<tc>, window_params = [{transform_indices = @transform_0, window_bounds = array<i64: 128, 512>}, {transform_indices = @transform_1, window_bounds = array<i64: 512, 256>}, {transform_indices = @transform_2, window_bounds = array<i64: 1, 256>}, {transform_indices = @transform_3, window_bounds = array<i64: 256, 512>}, {pipeline_mode = #tpu.pipeline_mode<synchronous>, transform_indices = @transform_4, window_bounds = array<i64: 1, 512>}, {transform_indices = @transform_5, window_bounds = array<i64: 128, 512>}]} {
    %c0_i32 = arith.constant 0 : i32
    %0 = arith.cmpi eq, %arg1, %c0_i32 : i32
    %1 = arith.extui %0 : i1 to i32
    %c0_i32_0 = arith.constant 0 : i32
    %2 = arith.cmpi ne, %1, %c0_i32_0 : i32
    scf.if %2 {
      %c0_15 = arith.constant 0 : index
      %c0_16 = arith.constant 0 : index
      %20 = vector.load %arg6[%c0_15, %c0_16] : memref<1x512xf32, #tpu.memory_space<vmem>>, vector<1x512xf32>
      %21 = vector.shape_cast %20 : vector<1x512xf32> to vector<1x512xf32>
      %22 = vector.broadcast %21 : vector<1x512xf32> to vector<128x512xf32>
      %c0_17 = arith.constant 0 : index
      %c0_18 = arith.constant 0 : index
      %23 = vector.load %arg8[%c0_17, %c0_18] : memref<128x512xf32, #tpu.memory_space<vmem>>, vector<128x512xf32>
      tpu.vector_store %arg8[%c0_17, %c0_18], %22 {strides = array<i32>} : memref<128x512xf32, #tpu.memory_space<vmem>>, vector<128x512xf32>,
    } else {
    }
    %c0 = arith.constant 0 : index
    %c0_1 = arith.constant 0 : index
    %3 = vector.load %arg2[%c0, %c0_1] : memref<128x512xbf16, #tpu.memory_space<vmem>>, vector<128x512xbf16>
    %c0_2 = arith.constant 0 : index
    %c0_3 = arith.constant 0 : index
    %4 = vector.load %arg3[%c0_2, %c0_3] : memref<512x256xbf16, #tpu.memory_space<vmem>>, vector<512x256xbf16>
    %cst = arith.constant dense<0.000000e+00> : vector<128x256xf32>
    %5 = tpu.matmul %3, %4, %cst {dimension_numbers = #tpu.dot_dimension_numbers<[1], [0], [0], [1], [0, 0, 1, 1], [], []>} : vector<128x512xbf16>, vector<512x256xbf16>, vector<128x256xf32> -> vector<128x256xf32>
    %c0_4 = arith.constant 0 : index
    %c0_5 = arith.constant 0 : index
    %6 = vector.load %arg4[%c0_4, %c0_5] : memref<1x256xf32, #tpu.memory_space<vmem>>, vector<1x256xf32>
    %7 = vector.broadcast %6 : vector<1x256xf32> to vector<128x256xf32>
    %8 = arith.addf %5, %7 : vector<128x256xf32>
    %cst_6 = arith.constant 0.000000e+00 : f32
    %9 = vector.broadcast %cst_6 : f32 to vector<128x256xf32>
    %10 = arith.maximumf %8, %9 : vector<128x256xf32>
    %c0_7 = arith.constant 0 : index
    %c0_8 = arith.constant 0 : index
    %11 = vector.load %arg8[%c0_7, %c0_8] : memref<128x512xf32, #tpu.memory_space<vmem>>, vector<128x512xf32>
    %12 = arith.truncf %10 : vector<128x256xf32> to vector<128x256xbf16>
    %c0_9 = arith.constant 0 : index
    %c0_10 = arith.constant 0 : index
    %13 = vector.load %arg5[%c0_9, %c0_10] : memref<256x512xbf16, #tpu.memory_space<vmem>>, vector<256x512xbf16>
    %cst_11 = arith.constant dense<0.000000e+00> : vector<128x512xf32>
    %14 = tpu.matmul %12, %13, %cst_11 {dimension_numbers = #tpu.dot_dimension_numbers<[1], [0], [0], [1], [0, 0, 1, 1], [], []>} : vector<128x256xbf16>, vector<256x512xbf16>, vector<128x512xf32> -> vector<128x512xf32>
    %15 = arith.addf %11, %14 : vector<128x512xf32>
    %c0_12 = arith.constant 0 : index
    %c0_13 = arith.constant 0 : index
    %16 = vector.load %arg8[%c0_12, %c0_13] : memref<128x512xf32, #tpu.memory_space<vmem>>, vector<128x512xf32>
    tpu.vector_store %arg8[%c0_12, %c0_13], %15 {strides = array<i32>} : memref<128x512xf32, #tpu.memory_space<vmem>>, vector<128x512xf32>,
    %c1_i32 = arith.constant 1 : i32
    %17 = arith.cmpi eq, %arg1, %c1_i32 : i32
    %18 = arith.extui %17 : i1 to i32
    %c0_i32_14 = arith.constant 0 : i32
    %19 = arith.cmpi ne, %18, %c0_i32_14 : i32
    scf.if %19 {
      %c0_15 = arith.constant 0 : index
      %c0_16 = arith.constant 0 : index
      %20 = vector.load %arg8[%c0_15, %c0_16] : memref<128x512xf32, #tpu.memory_space<vmem>>, vector<128x512xf32>
      %c0_17 = arith.constant 0 : index
      %c0_18 = arith.constant 0 : index
      %21 = vector.load %arg7[%c0_17, %c0_18] : memref<128x512xf32, #tpu.memory_space<vmem>>, vector<128x512xf32>
      tpu.vector_store %arg7[%c0_17, %c0_18], %20 {strides = array<i32>} : memref<128x512xf32, #tpu.memory_space<vmem>>, vector<128x512xf32>,
    } else {
    }
    return
  }
  func.func @transform_0(%arg0: i32, %arg1: i32) -> (i32, i32) {
    %c0_i32 = arith.constant 0 : i32
    %c0_i32_0 = arith.constant 0 : i32
    return %arg0, %c0_i32 : i32, i32
  }
  func.func @transform_1(%arg0: i32, %arg1: i32) -> (i32, i32) {
    %c0_i32 = arith.constant 0 : i32
    %c0_i32_0 = arith.constant 0 : i32
    return %c0_i32, %arg1 : i32, i32
  }
  func.func @transform_2(%arg0: i32, %arg1: i32) -> (i32, i32) {
    %c0_i32 = arith.constant 0 : i32
    %c0_i32_0 = arith.constant 0 : i32
    return %c0_i32, %arg1 : i32, i32
  }
  func.func @transform_3(%arg0: i32, %arg1: i32) -> (i32, i32) {
    %c0_i32 = arith.constant 0 : i32
    %c0_i32_0 = arith.constant 0 : i32
    return %arg1, %c0_i32 : i32, i32
  }
  func.func @transform_4(%arg0: i32, %arg1: i32) -> (i32, i32) {
    %c0_i32 = arith.constant 0 : i32
    %c0_i32_0 = arith.constant 0 : i32
    %c0_i32_1 = arith.constant 0 : i32
    return %c0_i32, %c0_i32_0 : i32, i32
  }
  func.func @transform_5(%arg0: i32, %arg1: i32) -> (i32, i32) {
    %c0_i32 = arith.constant 0 : i32
    %c0_i32_0 = arith.constant 0 : i32
    return %arg0, %c0_i32 : i32, i32
  }
}

</mosaic_0001>

<llo_original>
// kernel: feed_forward.1
$region0: #{feed_forward.1}
  #allocation0 [shape = 'u32[]', space=smem, size = 0x4, offset = 0x4, fixed_abs, tag = 'smem constant byte address 0x4 - core index']
  #allocation1 [shape = 'u32[144,128]{1,0:T(1,128)}', space=vmem, size = 0x12000, scoped, tag = 'internal scratch']
  #allocation2 [shape = 'f32[128,512]{1,0:T(8,128)}', space=vmem, size = 0x40000, scoped, tag = 'scratch operand']
  %s0 = inlined_call_operand.vmem [shape: bf16[128,512], index: 0, kind: input, shape index: {}]
  %s1 = inlined_call_operand.vmem [shape: bf16[512,512], index: 1, kind: input, shape index: {}]
  %s2 = inlined_call_operand.vmem [shape: f32[1,512], index: 2, kind: input, shape index: {}]
  %s3 = inlined_call_operand.vmem [shape: bf16[512,512], index: 3, kind: input, shape index: {}]
  %s4 = inlined_call_operand.vmem [shape: f32[1,512], index: 4, kind: input, shape index: {}]
  %s5 = inlined_call_operand.vmem [shape: f32[128,512], index: 5, kind: output, shape index: {}]
  %s6 = sld [smem:[#allocation0]]
  $region99: #{feed_forward.1} parent=0
    _
  %s8 = ssub.s32 1, %s6
  %s9 = scalar_select 0, %s8, %s6
  $region1: #{feed_forward.1} parent=0
    #allocation3 [shape = 'u8[524288]{0}', space=vmem, size = 0x80000, scoped, tag = 'input window, operand 1']
    loop: start=0, step=1, limit=4
    $region2: #{feed_forward.1} parent=1 // loop_pre_header
      _
    $region3: #{feed_forward.1} parent=1 // loop_header
      %s11 = sphi 0, %s15
      %p12 = scmp.ge.s32.totalorder %s11, 4
      %s18 = sphi 0, %s30
      %s19 = sphi 0, %s26
      %s20 = sphi 0, %s18
      %s21 = sphi 0, %s19
      %s22 = sphi 0, %s20
      %s23 = sphi 0, %s21
      %s33 = sphi 0, %s35
      %s36 = sphi 0, %s33
      %s37 = sphi 0, %s36
      %s53 = sphi 0, %s37
      %s59 = sphi 0, %s61
      %s62 = sphi 0, %s59
      %s63 = sphi 0, %s62
      %s79 = sphi 0, %s63
      %s85 = sphi 0, %s87
      %s88 = sphi 0, %s85
      %s89 = sphi 0, %s88
      %s105 = sphi 0, %s89
      %s111 = sphi 0, %s113
      %s114 = sphi 0, %s111
      %s115 = sphi 0, %s114
      %s131 = sphi 0, %s115
      %s135 = sphi 0, %s135
      %s137 = sphi 0, %s135
      %s138 = sphi 0, %s137
      %s152 = sphi 0, %s138
      %s158 = sphi 0, %s160
      %s161 = sphi 0, %s158
      %s162 = sphi 0, %s161
      %s178 = sphi 0, %s162
    $region4: #{feed_forward.1} parent=1 // loop_header_branch
      %14 = sbr.rel (%p12) target = $region8
    $region5: #{feed_forward.1} parent=1 // loop_body
      %s16 = ssub.s32 %s11, 1
      %s17 = ssub.s32 %s11, 2
      %s24 = sadd.s32 1, %s19
      %p25 = scmp.ge.s32.totalorder %s24, 2
      %s26 = scalar_select %p25, 0, %s24
      %s27 = sadd.s32 1, %s18
      %s28 = scalar_select %p25, %s27, %s18
      %p29 = scmp.ge.s32.totalorder %s28, 1
      %s30 = scalar_select %p29, 0, %s28
      %s31 = ssub.s32 %s18, %s30
      %p32 = scmp.eq.s32.totalorder %s31, 0
      %s34 = sadd.s32 %s33, 1
      %s35 = scalar_select %p32, %s33, %s34
      %p38 = pneg %p32
      %p39 = scmp.eq.s32.totalorder %s11, 1
      %p40 = por %p38, %p39
      %p41 = scmp.ne.s32.totalorder %s33, %s36
      %p42 = scmp.eq.s32.totalorder %s11, 0
      %p43 = por %p41, %p42
      %p44 = scmp.ne.s32.totalorder %s33, %s36
      %p45 = scmp.eq.s32.totalorder %s16, 1
      %p46 = por %p44, %p45
      %p47 = scmp.ne.s32.totalorder %s36, %s37
      %p48 = scmp.eq.s32.totalorder %s16, 0
      %p49 = por %p47, %p48
      %p50 = scmp.ne.s32.totalorder %s36, %s37
      %p51 = scmp.eq.s32.totalorder %s17, 1
      %p52 = por %p50, %p51
      %p54 = scmp.ne.s32.totalorder %s37, %s53
      %p55 = scmp.eq.s32.totalorder %s17, 0
      %p56 = por %p54, %p55
      %s57 = ssub.s32 %s19, %s26
      %p58 = scmp.eq.s32.totalorder %s57, 0
      %s60 = sadd.s32 %s59, 1
      %s61 = scalar_select %p58, %s59, %s60
      %p64 = pneg %p58
      %p65 = scmp.eq.s32.totalorder %s11, 1
      %p66 = por %p64, %p65
      %p67 = scmp.ne.s32.totalorder %s59, %s62
      %p68 = scmp.eq.s32.totalorder %s11, 0
      %p69 = por %p67, %p68
      %p70 = scmp.ne.s32.totalorder %s59, %s62
      %p71 = scmp.eq.s32.totalorder %s16, 1
      %p72 = por %p70, %p71
      %p73 = scmp.ne.s32.totalorder %s62, %s63
      %p74 = scmp.eq.s32.totalorder %s16, 0
      %p75 = por %p73, %p74
      %p76 = scmp.ne.s32.totalorder %s62, %s63
      %p77 = scmp.eq.s32.totalorder %s17, 1
      %p78 = por %p76, %p77
      %p80 = scmp.ne.s32.totalorder %s63, %s79
      %p81 = scmp.eq.s32.totalorder %s17, 0
      %p82 = por %p80, %p81
      %s83 = ssub.s32 %s19, %s26
      %p84 = scmp.eq.s32.totalorder %s83, 0
      %s86 = sadd.s32 %s85, 1
      %s87 = scalar_select %p84, %s85, %s86
      %p90 = pneg %p84
      %p91 = scmp.eq.s32.totalorder %s11, 1
      %p92 = por %p90, %p91
      %p93 = scmp.ne.s32.totalorder %s85, %s88
      %p94 = scmp.eq.s32.totalorder %s11, 0
      %p95 = por %p93, %p94
      %p96 = scmp.ne.s32.totalorder %s85, %s88
      %p97 = scmp.eq.s32.totalorder %s16, 1
      %p98 = por %p96, %p97
      %p99 = scmp.ne.s32.totalorder %s88, %s89
      %p100 = scmp.eq.s32.totalorder %s16, 0
      %p101 = por %p99, %p100
      %p102 = scmp.ne.s32.totalorder %s88, %s89
      %p103 = scmp.eq.s32.totalorder %s17, 1
      %p104 = por %p102, %p103
      %p106 = scmp.ne.s32.totalorder %s89, %s105
      %p107 = scmp.eq.s32.totalorder %s17, 0
      %p108 = por %p106, %p107
      %s109 = ssub.s32 %s19, %s26
      %p110 = scmp.eq.s32.totalorder %s109, 0
      %s112 = sadd.s32 %s111, 1
      %s113 = scalar_select %p110, %s111, %s112
      %p116 = pneg %p110
      %p117 = scmp.eq.s32.totalorder %s11, 1
      %p118 = por %p116, %p117
      %p119 = scmp.ne.s32.totalorder %s111, %s114
      %p120 = scmp.eq.s32.totalorder %s11, 0
      %p121 = por %p119, %p120
      %p122 = scmp.ne.s32.totalorder %s111, %s114
      %p123 = scmp.eq.s32.totalorder %s16, 1
      %p124 = por %p122, %p123
      %p125 = scmp.ne.s32.totalorder %s114, %s115
      %p126 = scmp.eq.s32.totalorder %s16, 0
      %p127 = por %p125, %p126
      %p128 = scmp.ne.s32.totalorder %s114, %s115
      %p129 = scmp.eq.s32.totalorder %s17, 1
      %p130 = por %p128, %p129
      %p132 = scmp.ne.s32.totalorder %s115, %s131
      %p133 = scmp.eq.s32.totalorder %s17, 0
      %p134 = por %p132, %p133
      %s136 = sadd.s32 %s135, 1
      %p139 = scmp.eq.s32.totalorder %s11, 1
      %p140 = scmp.ne.s32.totalorder %s135, %s137
      %p141 = scmp.eq.s32.totalorder %s11, 0
      %p142 = por %p140, %p141
      %p143 = scmp.ne.s32.totalorder %s135, %s137
      %p144 = scmp.eq.s32.totalorder %s16, 1
      %p145 = por %p143, %p144
      %p146 = scmp.ne.s32.totalorder %s137, %s138
      %p147 = scmp.eq.s32.totalorder %s16, 0
      %p148 = por %p146, %p147
      %p149 = scmp.ne.s32.totalorder %s137, %s138
      %p150 = scmp.eq.s32.totalorder %s17, 1
      %p151 = por %p149, %p150
      %p153 = scmp.ne.s32.totalorder %s138, %s152
      %p154 = scmp.eq.s32.totalorder %s17, 0
      %p155 = por %p153, %p154
      %s156 = ssub.s32 %s18, %s30
      %p157 = scmp.eq.s32.totalorder %s156, 0
      %s159 = sadd.s32 %s158, 1
      %s160 = scalar_select %p157, %s158, %s159
      %p163 = pneg %p157
      %p164 = scmp.eq.s32.totalorder %s11, 1
      %p165 = por %p163, %p164
      %p166 = scmp.ne.s32.totalorder %s158, %s161
      %p167 = scmp.eq.s32.totalorder %s11, 0
      %p168 = por %p166, %p167
      %p169 = scmp.ne.s32.totalorder %s158, %s161
      %p170 = scmp.eq.s32.totalorder %s16, 1
      %p171 = por %p169, %p170
      %p172 = scmp.ne.s32.totalorder %s161, %s162
      %p173 = scmp.eq.s32.totalorder %s16, 0
      %p174 = por %p172, %p173
      %p175 = scmp.ne.s32.totalorder %s161, %s162
      %p176 = scmp.eq.s32.totalorder %s17, 1
      %p177 = por %p175, %p176
      %p179 = scmp.ne.s32.totalorder %s162, %s178
      %p180 = scmp.eq.s32.totalorder %s17, 0
      %p181 = por %p179, %p180
      %p182 = scmp.le.s32.totalorder 1, %s11
      %p183 = scmp.lt.s32.totalorder %s11, 3
      %p184 = pnand %p182, %p183
      %p185 = pneg %p184
      // Predicated region
      $region9: #{feed_forward.1} parent=5 // pred_check
        _
      $region10: #{feed_forward.1} parent=5 // pred_check_branch
        %187 = sbr.rel (%p184) target = $region12
      $region11: #{feed_forward.1} parent=5 // pred_region
        %s188 = ssub.s32 %s11, 1
        // Predicated region
        $region13: #{feed_forward.1} parent=11 // pred_check
          %p189 = pneg %p49
        $region14: #{feed_forward.1} parent=11 // pred_check_branch
          %191 = sbr.rel (%p189) target = $region16
        $region15: #{feed_forward.1} parent=11 // pred_region
          %s192 = smul.u32 16, %s20
          %p193 = scmp.lt.s32.totalorder %s192, 15
          %s194 = scalar_select %p193, %s192, 15
          %s195 = smul.addr %s194, 4
          %s196 = smul.addr %s195, 4
          %s197 = scalar_lea.vmem %s0, %s196
          %s198 = smul.u32 16, %s20
        $region16: #{feed_forward.1} parent=11 // pred_fallthru
          _
        // Predicated region
        $region17: #{feed_forward.1} parent=11 // pred_check
          %p199 = pneg %p148
        $region18: #{feed_forward.1} parent=11 // pred_check_branch
          %201 = sbr.rel (%p199) target = $region20
        $region19: #{feed_forward.1} parent=11 // pred_region
          _
        $region20: #{feed_forward.1} parent=11 // pred_fallthru
          _
      $region12: #{feed_forward.1} parent=5 // pred_fallthru
        _
      %p202 = scmp.lt.s32.totalorder %s11, 2
      // Predicated region
      $region21: #{feed_forward.1} parent=5 // pred_check
        %p203 = pneg %p202
      $region22: #{feed_forward.1} parent=5 // pred_check_branch
        %205 = sbr.rel (%p203) target = $region24
      $region23: #{feed_forward.1} parent=5 // pred_region
        // Predicated region
        $region25: #{feed_forward.1} parent=23 // pred_check
          %p206 = pneg %p69
        $region26: #{feed_forward.1} parent=23 // pred_check_branch
          %208 = sbr.rel (%p206) target = $region28
        $region27: #{feed_forward.1} parent=23 // pred_region
          %s209 = sand.u32 %s59, 1
          %s210 = sand.u32 %s59, 1
          %s211 = smul.addr %s210, 512
          %s212 = scalar_lea.vmem [#allocation3], %s211
          %s213 = smul.u32 2, %s19
          %s214 = smul.addr %s213, 4
          %s215 = scalar_lea.vmem %s1, %s214
          // Predicated region
          $region29: #{feed_forward.1} parent=27 // pred_check
            _
          $region30: #{feed_forward.1} parent=27 // pred_check_branch
            %217 = sbr.rel (0) target = $region32
          $region31: #{feed_forward.1} parent=27 // pred_region
            // Predicated region
            $region33: #{feed_forward.1} parent=31 // pred_check
              _
            $region34: #{feed_forward.1} parent=31 // pred_check_branch
              %219 = sbr.rel (0) target = $region36
            $region35: #{feed_forward.1} parent=31 // pred_region
              // Predicated region
              $region48: #{feed_forward.1} parent=35 // pred_check
                _
              $region49: #{feed_forward.1} parent=35 // pred_check_branch
                %361 = sbr.rel (0) target = $region51
              $region50: #{feed_forward.1} parent=35 // pred_region
                loop: start=0, step=1, limit=1
                $region52: #{feed_forward.1} parent=50 // loop_pre_header
                  _
                $region53: #{feed_forward.1} parent=50 // loop_header
                  %s363 = sphi 0, %s367
                  %p364 = scmp.ge.s32.totalorder %s363, 1
                  %s368 = sphi %s215, %s215
                  %s369 = sphi %s212, %s212
                $region54: #{feed_forward.1} parent=50 // loop_header_branch
                  %366 = sbr.rel (%p364) target = $region58
                $region55: #{feed_forward.1} parent=50 // loop_body
                  %v370 = vld [vmem:[%s368] sm:$0xff]
                  %371 = vst [vmem:[%s369] sm:$0xff] %v370
                  %v372 = vld [vmem:[%s368 + $0x10] sm:$0xff]
                  %373 = vst [vmem:[%s369 + $0x8] sm:$0xff] %v372
                  %v374 = vld [vmem:[%s368 + $0x20] sm:$0xff]
                  %375 = vst [vmem:[%s369 + $0x10] sm:$0xff] %v374
                  %v376 = vld [vmem:[%s368 + $0x30] sm:$0xff]
                  %377 = vst [vmem:[%s369 + $0x18] sm:$0xff] %v376
                  %v378 = vld [vmem:[%s368 + $0x40] sm:$0xff]
                  %379 = vst [vmem:[%s369 + $0x20] sm:$0xff] %v378
                  %v380 = vld [vmem:[%s368 + $0x50] sm:$0xff]
                  %381 = vst [vmem:[%s369 + $0x28] sm:$0xff] %v380
                  %v382 = vld [vmem:[%s368 + $0x60] sm:$0xff]
                  %383 = vst [vmem:[%s369 + $0x30] sm:$0xff] %v382
                  %v384 = vld [vmem:[%s368 + $0x70] sm:$0xff]
                  %385 = vst [vmem:[%s369 + $0x38] sm:$0xff] %v384
                  %v386 = vld [vmem:[%s368 + $0x80] sm:$0xff]
                  %387 = vst [vmem:[%s369 + $0x40] sm:$0xff] %v386
                  %v388 = vld [vmem:[%s368 + $0x90] sm:$0xff]
                  %389 = vst [vmem:[%s369 + $0x48] sm:$0xff] %v388
                  %v390 = vld [vmem:[%s368 + $0xa0] sm:$0xff]
                  %391 = vst [vmem:[%s369 + $0x50] sm:$0xff] %v390
                  %v392 = vld [vmem:[%s368 + $0xb0] sm:$0xff]
                  %393 = vst [vmem:[%s369 + $0x58] sm:$0xff] %v392
                  %v394 = vld [vmem:[%s368 + $0xc0] sm:$0xff]
                  %395 = vst [vmem:[%s369 + $0x60] sm:$0xff] %v394
                  %v396 = vld [vmem:[%s368 + $0xd0] sm:$0xff]
                  %397 = vst [vmem:[%s369 + $0x68] sm:$0xff] %v396
                  %v398 = vld [vmem:[%s368 + $0xe0] sm:$0xff]
                  %399 = vst [vmem:[%s369 + $0x70] sm:$0xff] %v398
                  %v400 = vld [vmem:[%s368 + $0xf0] sm:$0xff]
                  %401 = vst [vmem:[%s369 + $0x78] sm:$0xff] %v400
                  %v402 = vld [vmem:[%s368 + $0x100] sm:$0xff]
                  %403 = vst [vmem:[%s369 + $0x80] sm:$0xff] %v402
                  %v404 = vld [vmem:[%s368 + $0x110] sm:$0xff]
                  %405 = vst [vmem:[%s369 + $0x88] sm:$0xff] %v404
                  %v406 = vld [vmem:[%s368 + $0x120] sm:$0xff]
                  %407 = vst [vmem:[%s369 + $0x90] sm:$0xff] %v406
                  %v408 = vld [vmem:[%s368 + $0x130] sm:$0xff]
                  %409 = vst [vmem:[%s369 + $0x98] sm:$0xff] %v408
                  %v410 = vld [vmem:[%s368 + $0x140] sm:$0xff]
                  %411 = vst [vmem:[%s369 + $0xa0] sm:$0xff] %v410
                  %v412 = vld [vmem:[%s368 + $0x150] sm:$0xff]
                  %413 = vst [vmem:[%s369 + $0xa8] sm:$0xff] %v412
                  %v414 = vld [vmem:[%s368 + $0x160] sm:$0xff]
                  %415 = vst [vmem:[%s369 + $0xb0] sm:$0xff] %v414
                  %v416 = vld [vmem:[%s368 + $0x170] sm:$0xff]
                  %417 = vst [vmem:[%s369 + $0xb8] sm:$0xff] %v416
                  %v418 = vld [vmem:[%s368 + $0x180] sm:$0xff]
                  %419 = vst [vmem:[%s369 + $0xc0] sm:$0xff] %v418
                  %v420 = vld [vmem:[%s368 + $0x190] sm:$0xff]
                  %421 = vst [vmem:[%s369 + $0xc8] sm:$0xff] %v420
                  %v422 = vld [vmem:[%s368 + $0x1a0] sm:$0xff]
                  %423 = vst [vmem:[%s369 + $0xd0] sm:$0xff] %v422
                  %v424 = vld [vmem:[%s368 + $0x1b0] sm:$0xff]
                  %425 = vst [vmem:[%s369 + $0xd8] sm:$0xff] %v424
                  %v426 = vld [vmem:[%s368 + $0x1c0] sm:$0xff]
                  %427 = vst [vmem:[%s369 + $0xe0] sm:$0xff] %v426
                  %v428 = vld [vmem:[%s368 + $0x1d0] sm:$0xff]
                  %429 = vst [vmem:[%s369 + $0xe8] sm:$0xff] %v428
                  %v430 = vld [vmem:[%s368 + $0x1e0] sm:$0xff]
                  %431 = vst [vmem:[%s369 + $0xf0] sm:$0xff] %v430
                  %v432 = vld [vmem:[%s368 + $0x1f0] sm:$0xff]
                  %433 = vst [vmem:[%s369 + $0xf8] sm:$0xff] %v432
                  %v434 = vld [vmem:[%s368 + $0x200] sm:$0xff]
                  %435 = vst [vmem:[%s369 + $0x100] sm:$0xff] %v434
                  %v436 = vld [vmem:[%s368 + $0x210] sm:$0xff]
                  %437 = vst [vmem:[%s369 + $0x108] sm:$0xff] %v436
                  %v438 = vld [vmem:[%s368 + $0x220] sm:$0xff]
                  %439 = vst [vmem:[%s369 + $0x110] sm:$0xff] %v438
                  %v440 = vld [vmem:[%s368 + $0x230] sm:$0xff]
                  %441 = vst [vmem:[%s369 + $0x118] sm:$0xff] %v440
                  %v442 = vld [vmem:[%s368 + $0x240] sm:$0xff]
                  %443 = vst [vmem:[%s369 + $0x120] sm:$0xff] %v442
                  %v444 = vld [vmem:[%s368 + $0x250] sm:$0xff]
                  %445 = vst [vmem:[%s369 + $0x128] sm:$0xff] %v444
                  %v446 = vld [vmem:[%s368 + $0x260] sm:$0xff]
                  %447 = vst [vmem:[%s369 + $0x130] sm:$0xff] %v446
                  %v448 = vld [vmem:[%s368 + $0x270] sm:$0xff]
                  %449 = vst [vmem:[%s369 + $0x138] sm:$0xff] %v448
                  %v450 = vld [vmem:[%s368 + $0x280] sm:$0xff]
                  %451 = vst [vmem:[%s369 + $0x140] sm:$0xff] %v450
                  %v452 = vld [vmem:[%s368 + $0x290] sm:$0xff]
                  %453 = vst [vmem:[%s369 + $0x148] sm:$0xff] %v452
                  %v454 = vld [vmem:[%s368 + $0x2a0] sm:$0xff]
                  %455 = vst [vmem:[%s369 + $0x150] sm:$0xff] %v454
                  %v456 = vld [vmem:[%s368 + $0x2b0] sm:$0xff]
                  %457 = vst [vmem:[%s369 + $0x158] sm:$0xff] %v456
                  %v458 = vld [vmem:[%s368 + $0x2c0] sm:$0xff]
                  %459 = vst [vmem:[%s369 + $0x160] sm:$0xff] %v458
                  %v460 = vld [vmem:[%s368 + $0x2d0] sm:$0xff]
                  %461 = vst [vmem:[%s369 + $0x168] sm:$0xff] %v460
                  %v462 = vld [vmem:[%s368 + $0x2e0] sm:$0xff]
                  %463 = vst [vmem:[%s369 + $0x170] sm:$0xff] %v462
                  %v464 = vld [vmem:[%s368 + $0x2f0] sm:$0xff]
                  %465 = vst [vmem:[%s369 + $0x178] sm:$0xff] %v464
                  %v466 = vld [vmem:[%s368 + $0x300] sm:$0xff]
                  %467 = vst [vmem:[%s369 + $0x180] sm:$0xff] %v466
                  %v468 = vld [vmem:[%s368 + $0x310] sm:$0xff]
                  %469 = vst [vmem:[%s369 + $0x188] sm:$0xff] %v468
                  %v470 = vld [vmem:[%s368 + $0x320] sm:$0xff]
                  %471 = vst [vmem:[%s369 + $0x190] sm:$0xff] %v470
                  %v472 = vld [vmem:[%s368 + $0x330] sm:$0xff]
                  %473 = vst [vmem:[%s369 + $0x198] sm:$0xff] %v472
                  %v474 = vld [vmem:[%s368 + $0x340] sm:$0xff]
                  %475 = vst [vmem:[%s369 + $0x1a0] sm:$0xff] %v474
                  %v476 = vld [vmem:[%s368 + $0x350] sm:$0xff]
                  %477 = vst [vmem:[%s369 + $0x1a8] sm:$0xff] %v476
                  %v478 = vld [vmem:[%s368 + $0x360] sm:$0xff]
                  %479 = vst [vmem:[%s369 + $0x1b0] sm:$0xff] %v478
                  %v480 = vld [vmem:[%s368 + $0x370] sm:$0xff]
                  %481 = vst [vmem:[%s369 + $0x1b8] sm:$0xff] %v480
                  %v482 = vld [vmem:[%s368 + $0x380] sm:$0xff]
                  %483 = vst [vmem:[%s369 + $0x1c0] sm:$0xff] %v482
                  %v484 = vld [vmem:[%s368 + $0x390] sm:$0xff]
                  %485 = vst [vmem:[%s369 + $0x1c8] sm:$0xff] %v484
                  %v486 = vld [vmem:[%s368 + $0x3a0] sm:$0xff]
                  %487 = vst [vmem:[%s369 + $0x1d0] sm:$0xff] %v486
                  %v488 = vld [vmem:[%s368 + $0x3b0] sm:$0xff]
                  %489 = vst [vmem:[%s369 + $0x1d8] sm:$0xff] %v488
                  %v490 = vld [vmem:[%s368 + $0x3c0] sm:$0xff]
                  %491 = vst [vmem:[%s369 + $0x1e0] sm:$0xff] %v490
                  %v492 = vld [vmem:[%s368 + $0x3d0] sm:$0xff]
                  %493 = vst [vmem:[%s369 + $0x1e8] sm:$0xff] %v492
                  %v494 = vld [vmem:[%s368 + $0x3e0] sm:$0xff]
                  %495 = vst [vmem:[%s369 + $0x1f0] sm:$0xff] %v494
                  %v496 = vld [vmem:[%s368 + $0x3f0] sm:$0xff]
                  %497 = vst [vmem:[%s369 + $0x1f8] sm:$0xff] %v496
                $region56: #{feed_forward.1} parent=50 // loop_footer
                  %s367 = sadd.s32 1, %s363
                $region57: #{feed_forward.1} parent=50 // loop_footer_branch
                  %362 = sbr.rel target = $region53
                $region58: #{feed_forward.1} parent=50 // loop_exit
                  _
              $region51: #{feed_forward.1} parent=35 // pred_fallthru
                _
              // Predicated region
              $region59: #{feed_forward.1} parent=35 // pred_check
                _
              $region60: #{feed_forward.1} parent=35 // pred_check_branch
                %499 = sbr.rel target = $region62
              $region61: #{feed_forward.1} parent=35 // pred_region
                _
              $region62: #{feed_forward.1} parent=35 // pred_fallthru
                _
            $region36: #{feed_forward.1} parent=31 // pred_fallthru
              _
            // Predicated region
            $region37: #{feed_forward.1} parent=31 // pred_check
              _
            $region38: #{feed_forward.1} parent=31 // pred_check_branch
              %221 = sbr.rel target = $region40
            $region39: #{feed_forward.1} parent=31 // pred_region
              %s223 = ssub.s32 256, 1
              loop: start=0, step=1, limit=1
              $region41: #{feed_forward.1} parent=39 // loop_pre_header
                _
              $region42: #{feed_forward.1} parent=39 // loop_header
                %s225 = sphi 0, %s229
                %p226 = scmp.ge.s32.totalorder %s225, 1
                %s230 = sphi %s215, %s215
                %s231 = sphi %s212, %s212
              $region43: #{feed_forward.1} parent=39 // loop_header_branch
                %228 = sbr.rel (%p226) target = $region47
              $region44: #{feed_forward.1} parent=39 // loop_body
                %v232 = vld [vmem:[%s230] sm:%s223]
                %233 = vst [vmem:[%s231] sm:%s223] %v232
                %v234 = vld [vmem:[%s230 + $0x10] sm:%s223]
                %235 = vst [vmem:[%s231 + $0x8] sm:%s223] %v234
                %v236 = vld [vmem:[%s230 + $0x20] sm:%s223]
                %237 = vst [vmem:[%s231 + $0x10] sm:%s223] %v236
                %v238 = vld [vmem:[%s230 + $0x30] sm:%s223]
                %239 = vst [vmem:[%s231 + $0x18] sm:%s223] %v238
                %v240 = vld [vmem:[%s230 + $0x40] sm:%s223]
                %241 = vst [vmem:[%s231 + $0x20] sm:%s223] %v240
                %v242 = vld [vmem:[%s230 + $0x50] sm:%s223]
                %243 = vst [vmem:[%s231 + $0x28] sm:%s223] %v242
                %v244 = vld [vmem:[%s230 + $0x60] sm:%s223]
                %245 = vst [vmem:[%s231 + $0x30] sm:%s223] %v244
                %v246 = vld [vmem:[%s230 + $0x70] sm:%s223]
                %247 = vst [vmem:[%s231 + $0x38] sm:%s223] %v246
                %v248 = vld [vmem:[%s230 + $0x80] sm:%s223]
                %249 = vst [vmem:[%s231 + $0x40] sm:%s223] %v248
                %v250 = vld [vmem:[%s230 + $0x90] sm:%s223]
                %251 = vst [vmem:[%s231 + $0x48] sm:%s223] %v250
                %v252 = vld [vmem:[%s230 + $0xa0] sm:%s223]
                %253 = vst [vmem:[%s231 + $0x50] sm:%s223] %v252
                %v254 = vld [vmem:[%s230 + $0xb0] sm:%s223]
                %255 = vst [vmem:[%s231 + $0x58] sm:%s223] %v254
                %v256 = vld [vmem:[%s230 + $0xc0] sm:%s223]
                %257 = vst [vmem:[%s231 + $0x60] sm:%s223] %v256
                %v258 = vld [vmem:[%s230 + $0xd0] sm:%s223]
                %259 = vst [vmem:[%s231 + $0x68] sm:%s223] %v258
                %v260 = vld [vmem:[%s230 + $0xe0] sm:%s223]
                %261 = vst [vmem:[%s231 + $0x70] sm:%s223] %v260
                %v262 = vld [vmem:[%s230 + $0xf0] sm:%s223]
                %263 = vst [vmem:[%s231 + $0x78] sm:%s223] %v262
                %v264 = vld [vmem:[%s230 + $0x100] sm:%s223]
                %265 = vst [vmem:[%s231 + $0x80] sm:%s223] %v264
                %v266 = vld [vmem:[%s230 + $0x110] sm:%s223]
                %267 = vst [vmem:[%s231 + $0x88] sm:%s223] %v266
                %v268 = vld [vmem:[%s230 + $0x120] sm:%s223]
                %269 = vst [vmem:[%s231 + $0x90] sm:%s223] %v268
                %v270 = vld [vmem:[%s230 + $0x130] sm:%s223]
                %271 = vst [vmem:[%s231 + $0x98] sm:%s223] %v270
                %v272 = vld [vmem:[%s230 + $0x140] sm:%s223]
                %273 = vst [vmem:[%s231 + $0xa0] sm:%s223] %v272
                %v274 = vld [vmem:[%s230 + $0x150] sm:%s223]
                %275 = vst [vmem:[%s231 + $0xa8] sm:%s223] %v274
                %v276 = vld [vmem:[%s230 + $0x160] sm:%s223]
                %277 = vst [vmem:[%s231 + $0xb0] sm:%s223] %v276
                %v278 = vld [vmem:[%s230 + $0x170] sm:%s223]
                %279 = vst [vmem:[%s231 + $0xb8] sm:%s223] %v278
                %v280 = vld [vmem:[%s230 + $0x180] sm:%s223]
                %281 = vst [vmem:[%s231 + $0xc0] sm:%s223] %v280
                %v282 = vld [vmem:[%s230 + $0x190] sm:%s223]
                %283 = vst [vmem:[%s231 + $0xc8] sm:%s223] %v282
                %v284 = vld [vmem:[%s230 + $0x1a0] sm:%s223]
                %285 = vst [vmem:[%s231 + $0xd0] sm:%s223] %v284
                %v286 = vld [vmem:[%s230 + $0x1b0] sm:%s223]
                %287 = vst [vmem:[%s231 + $0xd8] sm:%s223] %v286
                %v288 = vld [vmem:[%s230 + $0x1c0] sm:%s223]
                %289 = vst [vmem:[%s231 + $0xe0] sm:%s223] %v288
                %v290 = vld [vmem:[%s230 + $0x1d0] sm:%s223]
                %291 = vst [vmem:[%s231 + $0xe8] sm:%s223] %v290
                %v292 = vld [vmem:[%s230 + $0x1e0] sm:%s223]
                %293 = vst [vmem:[%s231 + $0xf0] sm:%s223] %v292
                %v294 = vld [vmem:[%s230 + $0x1f0] sm:%s223]
                %295 = vst [vmem:[%s231 + $0xf8] sm:%s223] %v294
                %v296 = vld [vmem:[%s230 + $0x200] sm:%s223]
                %297 = vst [vmem:[%s231 + $0x100] sm:%s223] %v296
                %v298 = vld [vmem:[%s230 + $0x210] sm:%s223]
                %299 = vst [vmem:[%s231 + $0x108] sm:%s223] %v298
                %v300 = vld [vmem:[%s230 + $0x220] sm:%s223]
                %301 = vst [vmem:[%s231 + $0x110] sm:%s223] %v300
                %v302 = vld [vmem:[%s230 + $0x230] sm:%s223]
                %303 = vst [vmem:[%s231 + $0x118] sm:%s223] %v302
                %v304 = vld [vmem:[%s230 + $0x240] sm:%s223]
                %305 = vst [vmem:[%s231 + $0x120] sm:%s223] %v304
                %v306 = vld [vmem:[%s230 + $0x250] sm:%s223]
                %307 = vst [vmem:[%s231 + $0x128] sm:%s223] %v306
                %v308 = vld [vmem:[%s230 + $0x260] sm:%s223]
                %309 = vst [vmem:[%s231 + $0x130] sm:%s223] %v308
                %v310 = vld [vmem:[%s230 + $0x270] sm:%s223]
                %311 = vst [vmem:[%s231 + $0x138] sm:%s223] %v310
                %v312 = vld [vmem:[%s230 + $0x280] sm:%s223]
                %313 = vst [vmem:[%s231 + $0x140] sm:%s223] %v312
                %v314 = vld [vmem:[%s230 + $0x290] sm:%s223]
                %315 = vst [vmem:[%s231 + $0x148] sm:%s223] %v314
                %v316 = vld [vmem:[%s230 + $0x2a0] sm:%s223]
                %317 = vst [vmem:[%s231 + $0x150] sm:%s223] %v316
                %v318 = vld [vmem:[%s230 + $0x2b0] sm:%s223]
                %319 = vst [vmem:[%s231 + $0x158] sm:%s223] %v318
                %v320 = vld [vmem:[%s230 + $0x2c0] sm:%s223]
                %321 = vst [vmem:[%s231 + $0x160] sm:%s223] %v320
                %v322 = vld [vmem:[%s230 + $0x2d0] sm:%s223]
                %323 = vst [vmem:[%s231 + $0x168] sm:%s223] %v322
                %v324 = vld [vmem:[%s230 + $0x2e0] sm:%s223]
                %325 = vst [vmem:[%s231 + $0x170] sm:%s223] %v324
                %v326 = vld [vmem:[%s230 + $0x2f0] sm:%s223]
                %327 = vst [vmem:[%s231 + $0x178] sm:%s223] %v326
                %v328 = vld [vmem:[%s230 + $0x300] sm:%s223]
                %329 = vst [vmem:[%s231 + $0x180] sm:%s223] %v328
                %v330 = vld [vmem:[%s230 + $0x310] sm:%s223]
                %331 = vst [vmem:[%s231 + $0x188] sm:%s223] %v330
                %v332 = vld [vmem:[%s230 + $0x320] sm:%s223]
                %333 = vst [vmem:[%s231 + $0x190] sm:%s223] %v332
                %v334 = vld [vmem:[%s230 + $0x330] sm:%s223]
                %335 = vst [vmem:[%s231 + $0x198] sm:%s223] %v334
                %v336 = vld [vmem:[%s230 + $0x340] sm:%s223]
                %337 = vst [vmem:[%s231 + $0x1a0] sm:%s223] %v336
                %v338 = vld [vmem:[%s230 + $0x350] sm:%s223]
                %339 = vst [vmem:[%s231 + $0x1a8] sm:%s223] %v338
                %v340 = vld [vmem:[%s230 + $0x360] sm:%s223]
                %341 = vst [vmem:[%s231 + $0x1b0] sm:%s223] %v340
                %v342 = vld [vmem:[%s230 + $0x370] sm:%s223]
                %343 = vst [vmem:[%s231 + $0x1b8] sm:%s223] %v342
                %v344 = vld [vmem:[%s230 + $0x380] sm:%s223]
                %345 = vst [vmem:[%s231 + $0x1c0] sm:%s223] %v344
                %v346 = vld [vmem:[%s230 + $0x390] sm:%s223]
                %347 = vst [vmem:[%s231 + $0x1c8] sm:%s223] %v346
                %v348 = vld [vmem:[%s230 + $0x3a0] sm:%s223]
                %349 = vst [vmem:[%s231 + $0x1d0] sm:%s223] %v348
                %v350 = vld [vmem:[%s230 + $0x3b0] sm:%s223]
                %351 = vst [vmem:[%s231 + $0x1d8] sm:%s223] %v350
                %v352 = vld [vmem:[%s230 + $0x3c0] sm:%s223]
                %353 = vst [vmem:[%s231 + $0x1e0] sm:%s223] %v352
                %v354 = vld [vmem:[%s230 + $0x3d0] sm:%s223]
                %355 = vst [vmem:[%s231 + $0x1e8] sm:%s223] %v354
                %v356 = vld [vmem:[%s230 + $0x3e0] sm:%s223]
                %357 = vst [vmem:[%s231 + $0x1f0] sm:%s223] %v356
                %v358 = vld [vmem:[%s230 + $0x3f0] sm:%s223]
                %359 = vst [vmem:[%s231 + $0x1f8] sm:%s223] %v358
              $region45: #{feed_forward.1} parent=39 // loop_footer
                %s229 = sadd.s32 1, %s225
              $region46: #{feed_forward.1} parent=39 // loop_footer_branch
                %224 = sbr.rel target = $region42
              $region47: #{feed_forward.1} parent=39 // loop_exit
                _
            $region40: #{feed_forward.1} parent=31 // pred_fallthru
              _
          $region32: #{feed_forward.1} parent=27 // pred_fallthru
            _
          %500 = vnop
        $region28: #{feed_forward.1} parent=23 // pred_fallthru
          _
        // Predicated region
        $region63: #{feed_forward.1} parent=23 // pred_check
          %p501 = pneg %p95
        $region64: #{feed_forward.1} parent=23 // pred_check_branch
          %503 = sbr.rel (%p501) target = $region66
        $region65: #{feed_forward.1} parent=23 // pred_region
          %s504 = smul.u32 2, %s19
          %p505 = scmp.lt.s32.totalorder %s504, 3
          %s506 = scalar_select %p505, %s504, 3
          %s507 = scalar_lea.vmem %s2, %s506
          %s508 = smul.u32 2, %s19
        $region66: #{feed_forward.1} parent=23 // pred_fallthru
          _
        // Predicated region
        $region67: #{feed_forward.1} parent=23 // pred_check
          %p509 = pneg %p121
        $region68: #{feed_forward.1} parent=23 // pred_check_branch
          %511 = sbr.rel (%p509) target = $region70
        $region69: #{feed_forward.1} parent=23 // pred_region
          %s512 = smul.u32 32, %s19
          %p513 = scmp.lt.s32.totalorder %s512, 63
          %s514 = scalar_select %p513, %s512, 63
          %s515 = smul.addr %s514, 4
          %s516 = smul.addr %s515, 4
          %s517 = scalar_lea.vmem %s3, %s516
          %s518 = smul.u32 32, %s19
        $region70: #{feed_forward.1} parent=23 // pred_fallthru
          _
      $region24: #{feed_forward.1} parent=5 // pred_fallthru
        _
      %p519 = scmp.le.s32.totalorder 1, %s11
      %p520 = scmp.lt.s32.totalorder %s11, 3
      %p521 = pnand %p519, %p520
      %p522 = pneg %p521
      // Predicated region
      $region71: #{feed_forward.1} parent=5 // pred_check
        _
      $region72: #{feed_forward.1} parent=5 // pred_check_branch
        %524 = sbr.rel (%p521) target = $region74
      $region73: #{feed_forward.1} parent=5 // pred_region
        %s525 = ssub.s32 %s11, 1
        %s526 = sand.u32 %s62, 1
        %s527 = sand.u32 %s62, 1
        %s528 = smul.addr %s527, 512
        %s529 = scalar_lea.vmem [#allocation3], %s528
        // Predicated region
        $region75: #{feed_forward.1} parent=73 // pred_check
          %p530 = pneg %p75
        $region76: #{feed_forward.1} parent=73 // pred_check_branch
          %532 = sbr.rel (%p530) target = $region78
        $region77: #{feed_forward.1} parent=73 // pred_region
          _
        $region78: #{feed_forward.1} parent=73 // pred_fallthru
          _
        %s533 = smul.u32 16, %s20
        %p534 = scmp.lt.s32.totalorder %s533, 15
        %s535 = scalar_select %p534, %s533, 15
        %s536 = smul.addr %s535, 4
        %s537 = smul.addr %s536, 4
        %s538 = scalar_lea.vmem %s0, %s537
        %p539 = pneg %p49
        %p540 = pneg %p46
        %s541 = sand.u32 %s62, 1
        %s542 = sand.u32 %s62, 1
        %s543 = smul.addr %s542, 512
        %s544 = scalar_lea.vmem [#allocation3], %s543
        %p545 = pneg %p75
        %p546 = pneg %p72
        %s547 = smul.u32 2, %s21
        %p548 = scmp.lt.s32.totalorder %s547, 3
        %s549 = scalar_select %p548, %s547, 3
        %s550 = scalar_lea.vmem %s2, %s549
        %p551 = pneg %p101
        %p552 = pneg %p98
        %s553 = smul.u32 32, %s21
        %p554 = scmp.lt.s32.totalorder %s553, 63
        %s555 = scalar_select %p554, %s553, 63
        %s556 = smul.addr %s555, 4
        %s557 = smul.addr %s556, 4
        %s558 = scalar_lea.vmem %s3, %s557
        %p559 = pneg %p127
        %p560 = pneg %p124
        %p561 = pneg %p148
        %p562 = pneg %p145
        %p563 = pneg %p174
        %p564 = pneg %p171
        %s565 = smul.u32 16, %s20
        %p566 = scmp.lt.s32.totalorder %s565, 15
        %s567 = scalar_select %p566, %s565, 15
        %s568 = smul.addr %s567, 4
        %s569 = smul.addr %s568, 8
        %s570 = scalar_lea.vmem %s5, %s569
        %s571 = smul.u32 16, %s20
        %p572 = scmp.lt.s32.totalorder %s571, 15
        %s573 = scalar_select %p572, %s571, 15
        %s574 = smul.addr %s573, 4
        %s575 = smul.addr %s574, 4
        %s576 = scalar_lea.vmem %s0, %s575
        %s577 = smul.u32 16, %s20
        %s578 = smul.u32 2, %s21
        %s579 = smul.u32 2, %s21
        %p580 = scmp.lt.s32.totalorder %s579, 3
        %s581 = scalar_select %p580, %s579, 3
        %s582 = scalar_lea.vmem %s2, %s581
        %s583 = smul.u32 2, %s21
        %s584 = smul.u32 32, %s21
        %p585 = scmp.lt.s32.totalorder %s584, 63
        %s586 = scalar_select %p585, %s584, 63
        %s587 = smul.addr %s586, 4
        %s588 = smul.addr %s587, 4
        %s589 = scalar_lea.vmem %s3, %s588
        %s590 = smul.u32 32, %s21
        %s591 = smul.u32 16, %s20
        %p592 = scmp.lt.s32.totalorder %s591, 15
        %s593 = scalar_select %p592, %s591, 15
        %s594 = smul.addr %s593, 4
        %s595 = smul.addr %s594, 8
        %s596 = scalar_lea.vmem %s5, %s595
        %s597 = smul.u32 16, %s20
        %p598 = scmp.eq.s32.totalorder %s21, 0
        // Predicated region
        $region79: #{feed_forward.1} parent=73 // pred_check
          %p599 = pneg %p598
        $region80: #{feed_forward.1} parent=73 // pred_check_branch
          %601 = sbr.rel (%p599) target = $region82
        $region81: #{feed_forward.1} parent=73 // pred_region
          %v602 = vld [vmem:[%s4] sm:$0xf]
          %v604 = vlaneseq
          %v605 = vshrl.u32 %v604, 7
          %v606 = vsub.s32 0, %v605
          %v607 = vrot.slane %v602, %v606
          %v608 = vlaneseq
          %v609 = vshrl.u32 %v608, 7
          %v610 = vsub.s32 1, %v609
          %v611 = vrot.slane %v602, %v610
          %v612 = vlaneseq
          %v613 = vshrl.u32 %v612, 7
          %v614 = vsub.s32 2, %v613
          %v615 = vrot.slane %v602, %v614
          %v616 = vlaneseq
          %v617 = vshrl.u32 %v616, 7
          %v618 = vsub.s32 3, %v617
          %v619 = vrot.slane %v602, %v618
          %624 = vst [vmem:[#allocation2] sm:$0xff] %v607
          %625 = vst [vmem:[#allocation2 + $0x8] sm:$0xff] %v611
          %626 = vst [vmem:[#allocation2 + $0x10] sm:$0xff] %v615
          %627 = vst [vmem:[#allocation2 + $0x18] sm:$0xff] %v619
          %628 = vst [vmem:[#allocation2 + $0x20] sm:$0xff] %v607
          %629 = vst [vmem:[#allocation2 + $0x28] sm:$0xff] %v611
          %630 = vst [vmem:[#allocation2 + $0x30] sm:$0xff] %v615
          %631 = vst [vmem:[#allocation2 + $0x38] sm:$0xff] %v619
          %632 = vst [vmem:[#allocation2 + $0x40] sm:$0xff] %v607
          %633 = vst [vmem:[#allocation2 + $0x48] sm:$0xff] %v611
          %634 = vst [vmem:[#allocation2 + $0x50] sm:$0xff] %v615
          %635 = vst [vmem:[#allocation2 + $0x58] sm:$0xff] %v619
          %636 = vst [vmem:[#allocation2 + $0x60] sm:$0xff] %v607
          %637 = vst [vmem:[#allocation2 + $0x68] sm:$0xff] %v611
          %638 = vst [vmem:[#allocation2 + $0x70] sm:$0xff] %v615
          %639 = vst [vmem:[#allocation2 + $0x78] sm:$0xff] %v619
          %640 = vst [vmem:[#allocation2 + $0x80] sm:$0xff] %v607
          %641 = vst [vmem:[#allocation2 + $0x88] sm:$0xff] %v611
          %642 = vst [vmem:[#allocation2 + $0x90] sm:$0xff] %v615
          %643 = vst [vmem:[#allocation2 + $0x98] sm:$0xff] %v619
          %644 = vst [vmem:[#allocation2 + $0xa0] sm:$0xff] %v607
          %645 = vst [vmem:[#allocation2 + $0xa8] sm:$0xff] %v611
          %646 = vst [vmem:[#allocation2 + $0xb0] sm:$0xff] %v615
          %647 = vst [vmem:[#allocation2 + $0xb8] sm:$0xff] %v619
          %648 = vst [vmem:[#allocation2 + $0xc0] sm:$0xff] %v607
          %649 = vst [vmem:[#allocation2 + $0xc8] sm:$0xff] %v611
          %650 = vst [vmem:[#allocation2 + $0xd0] sm:$0xff] %v615
          %651 = vst [vmem:[#allocation2 + $0xd8] sm:$0xff] %v619
          %652 = vst [vmem:[#allocation2 + $0xe0] sm:$0xff] %v607
          %653 = vst [vmem:[#allocation2 + $0xe8] sm:$0xff] %v611
          %654 = vst [vmem:[#allocation2 + $0xf0] sm:$0xff] %v615
          %655 = vst [vmem:[#allocation2 + $0xf8] sm:$0xff] %v619
          %656 = vst [vmem:[#allocation2 + $0x100] sm:$0xff] %v607
          %657 = vst [vmem:[#allocation2 + $0x108] sm:$0xff] %v611
          %658 = vst [vmem:[#allocation2 + $0x110] sm:$0xff] %v615
          %659 = vst [vmem:[#allocation2 + $0x118] sm:$0xff] %v619
          %660 = vst [vmem:[#allocation2 + $0x120] sm:$0xff] %v607
          %661 = vst [vmem:[#allocation2 + $0x128] sm:$0xff] %v611
          %662 = vst [vmem:[#allocation2 + $0x130] sm:$0xff] %v615
          %663 = vst [vmem:[#allocation2 + $0x138] sm:$0xff] %v619
          %664 = vst [vmem:[#allocation2 + $0x140] sm:$0xff] %v607
          %665 = vst [vmem:[#allocation2 + $0x148] sm:$0xff] %v611
          %666 = vst [vmem:[#allocation2 + $0x150] sm:$0xff] %v615
          %667 = vst [vmem:[#allocation2 + $0x158] sm:$0xff] %v619
          %668 = vst [vmem:[#allocation2 + $0x160] sm:$0xff] %v607
          %669 = vst [vmem:[#allocation2 + $0x168] sm:$0xff] %v611
          %670 = vst [vmem:[#allocation2 + $0x170] sm:$0xff] %v615
          %671 = vst [vmem:[#allocation2 + $0x178] sm:$0xff] %v619
          %672 = vst [vmem:[#allocation2 + $0x180] sm:$0xff] %v607
          %673 = vst [vmem:[#allocation2 + $0x188] sm:$0xff] %v611
          %674 = vst [vmem:[#allocation2 + $0x190] sm:$0xff] %v615
          %675 = vst [vmem:[#allocation2 + $0x198] sm:$0xff] %v619
          %676 = vst [vmem:[#allocation2 + $0x1a0] sm:$0xff] %v607
          %677 = vst [vmem:[#allocation2 + $0x1a8] sm:$0xff] %v611
          %678 = vst [vmem:[#allocation2 + $0x1b0] sm:$0xff] %v615
          %679 = vst [vmem:[#allocation2 + $0x1b8] sm:$0xff] %v619
          %680 = vst [vmem:[#allocation2 + $0x1c0] sm:$0xff] %v607
          %681 = vst [vmem:[#allocation2 + $0x1c8] sm:$0xff] %v611
          %682 = vst [vmem:[#allocation2 + $0x1d0] sm:$0xff] %v615
          %683 = vst [vmem:[#allocation2 + $0x1d8] sm:$0xff] %v619
          %684 = vst [vmem:[#allocation2 + $0x1e0] sm:$0xff] %v607
          %685 = vst [vmem:[#allocation2 + $0x1e8] sm:$0xff] %v611
          %686 = vst [vmem:[#allocation2 + $0x1f0] sm:$0xff] %v615
          %687 = vst [vmem:[#allocation2 + $0x1f8] sm:$0xff] %v619
        $region82: #{feed_forward.1} parent=73 // pred_fallthru
          _
        %v688 = vld [vmem:[%s576] sm:$0xff]
        %v689 = vld [vmem:[%s576 + $0x8] sm:$0xff]
        %v690 = vld [vmem:[%s576 + $0x10] sm:$0xff]
        %v691 = vld [vmem:[%s576 + $0x18] sm:$0xff]
        %v692 = vld [vmem:[%s576 + $0x20] sm:$0xff]
        %v693 = vld [vmem:[%s576 + $0x28] sm:$0xff]
        %v694 = vld [vmem:[%s576 + $0x30] sm:$0xff]
        %v695 = vld [vmem:[%s576 + $0x38] sm:$0xff]
        %v696 = vld [vmem:[%s576 + $0x40] sm:$0xff]
        %v697 = vld [vmem:[%s576 + $0x48] sm:$0xff]
        %v698 = vld [vmem:[%s576 + $0x50] sm:$0xff]
        %v699 = vld [vmem:[%s576 + $0x58] sm:$0xff]
        %v700 = vld [vmem:[%s576 + $0x60] sm:$0xff]
        %v701 = vld [vmem:[%s576 + $0x68] sm:$0xff]
        %v702 = vld [vmem:[%s576 + $0x70] sm:$0xff]
        %v703 = vld [vmem:[%s576 + $0x78] sm:$0xff]
        %v704 = vld [vmem:[%s576 + $0x80] sm:$0xff]
        %v705 = vld [vmem:[%s576 + $0x88] sm:$0xff]
        %v706 = vld [vmem:[%s576 + $0x90] sm:$0xff]
        %v707 = vld [vmem:[%s576 + $0x98] sm:$0xff]
        %v708 = vld [vmem:[%s576 + $0xa0] sm:$0xff]
        %v709 = vld [vmem:[%s576 + $0xa8] sm:$0xff]
        %v710 = vld [vmem:[%s576 + $0xb0] sm:$0xff]
        %v711 = vld [vmem:[%s576 + $0xb8] sm:$0xff]
        %v712 = vld [vmem:[%s576 + $0xc0] sm:$0xff]
        %v713 = vld [vmem:[%s576 + $0xc8] sm:$0xff]
        %v714 = vld [vmem:[%s576 + $0xd0] sm:$0xff]
        %v715 = vld [vmem:[%s576 + $0xd8] sm:$0xff]
        %v716 = vld [vmem:[%s576 + $0xe0] sm:$0xff]
        %v717 = vld [vmem:[%s576 + $0xe8] sm:$0xff]
        %v718 = vld [vmem:[%s576 + $0xf0] sm:$0xff]
        %v719 = vld [vmem:[%s576 + $0xf8] sm:$0xff]
        %v720 = vld [vmem:[%s529] sm:$0xff]
        %v721 = vld [vmem:[%s529 + $0x8] sm:$0xff]
        %v722 = vld [vmem:[%s529 + $0x10] sm:$0xff]
        %v723 = vld [vmem:[%s529 + $0x18] sm:$0xff]
        %v724 = vld [vmem:[%s529 + $0x20] sm:$0xff]
        %v725 = vld [vmem:[%s529 + $0x28] sm:$0xff]
        %v726 = vld [vmem:[%s529 + $0x30] sm:$0xff]
        %v727 = vld [vmem:[%s529 + $0x38] sm:$0xff]
        %v728 = vld [vmem:[%s529 + $0x40] sm:$0xff]
        %v729 = vld [vmem:[%s529 + $0x48] sm:$0xff]
        %v730 = vld [vmem:[%s529 + $0x50] sm:$0xff]
        %v731 = vld [vmem:[%s529 + $0x58] sm:$0xff]
        %v732 = vld [vmem:[%s529 + $0x60] sm:$0xff]
        %v733 = vld [vmem:[%s529 + $0x68] sm:$0xff]
        %v734 = vld [vmem:[%s529 + $0x70] sm:$0xff]
        %v735 = vld [vmem:[%s529 + $0x78] sm:$0xff]
        %v736 = vld [vmem:[%s529 + $0x80] sm:$0xff]
        %v737 = vld [vmem:[%s529 + $0x88] sm:$0xff]
        %v738 = vld [vmem:[%s529 + $0x90] sm:$0xff]
        %v739 = vld [vmem:[%s529 + $0x98] sm:$0xff]
        %v740 = vld [vmem:[%s529 + $0xa0] sm:$0xff]
        %v741 = vld [vmem:[%s529 + $0xa8] sm:$0xff]
        %v742 = vld [vmem:[%s529 + $0xb0] sm:$0xff]
        %v743 = vld [vmem:[%s529 + $0xb8] sm:$0xff]
        %v744 = vld [vmem:[%s529 + $0xc0] sm:$0xff]
        %v745 = vld [vmem:[%s529 + $0xc8] sm:$0xff]
        %v746 = vld [vmem:[%s529 + $0xd0] sm:$0xff]
        %v747 = vld [vmem:[%s529 + $0xd8] sm:$0xff]
        %v748 = vld [vmem:[%s529 + $0xe0] sm:$0xff]
        %v749 = vld [vmem:[%s529 + $0xe8] sm:$0xff]
        %v750 = vld [vmem:[%s529 + $0xf0] sm:$0xff]
        %v751 = vld [vmem:[%s529 + $0xf8] sm:$0xff]
        %v752 = vld [vmem:[%s529 + $0x100] sm:$0xff]
        %v753 = vld [vmem:[%s529 + $0x108] sm:$0xff]
        %v754 = vld [vmem:[%s529 + $0x110] sm:$0xff]
        %v755 = vld [vmem:[%s529 + $0x118] sm:$0xff]
        %v756 = vld [vmem:[%s529 + $0x120] sm:$0xff]
        %v757 = vld [vmem:[%s529 + $0x128] sm:$0xff]
        %v758 = vld [vmem:[%s529 + $0x130] sm:$0xff]
        %v759 = vld [vmem:[%s529 + $0x138] sm:$0xff]
        %v760 = vld [vmem:[%s529 + $0x140] sm:$0xff]
        %v761 = vld [vmem:[%s529 + $0x148] sm:$0xff]
        %v762 = vld [vmem:[%s529 + $0x150] sm:$0xff]
        %v763 = vld [vmem:[%s529 + $0x158] sm:$0xff]
        %v764 = vld [vmem:[%s529 + $0x160] sm:$0xff]
        %v765 = vld [vmem:[%s529 + $0x168] sm:$0xff]
        %v766 = vld [vmem:[%s529 + $0x170] sm:$0xff]
        %v767 = vld [vmem:[%s529 + $0x178] sm:$0xff]
        %v768 = vld [vmem:[%s529 + $0x180] sm:$0xff]
        %v769 = vld [vmem:[%s529 + $0x188] sm:$0xff]
        %v770 = vld [vmem:[%s529 + $0x190] sm:$0xff]
        %v771 = vld [vmem:[%s529 + $0x198] sm:$0xff]
        %v772 = vld [vmem:[%s529 + $0x1a0] sm:$0xff]
        %v773 = vld [vmem:[%s529 + $0x1a8] sm:$0xff]
        %v774 = vld [vmem:[%s529 + $0x1b0] sm:$0xff]
        %v775 = vld [vmem:[%s529 + $0x1b8] sm:$0xff]
        %v776 = vld [vmem:[%s529 + $0x1c0] sm:$0xff]
        %v777 = vld [vmem:[%s529 + $0x1c8] sm:$0xff]
        %v778 = vld [vmem:[%s529 + $0x1d0] sm:$0xff]
        %v779 = vld [vmem:[%s529 + $0x1d8] sm:$0xff]
        %v780 = vld [vmem:[%s529 + $0x1e0] sm:$0xff]
        %v781 = vld [vmem:[%s529 + $0x1e8] sm:$0xff]
        %v782 = vld [vmem:[%s529 + $0x1f0] sm:$0xff]
        %v783 = vld [vmem:[%s529 + $0x1f8] sm:$0xff]
        %v784 = vld [vmem:[%s582] sm:$0x3]
        %v786 = vlaneseq
        %v787 = vshrl.u32 %v786, 7
        %v788 = vsub.s32 0, %v787
        %v789 = vrot.slane %v784, %v788
        %v790 = vlaneseq
        %v791 = vshrl.u32 %v790, 7
        %v792 = vsub.s32 1, %v791
        %v793 = vrot.slane %v784, %v792
        %v828 = vunpack.c.l.b16 %v688
        %v829 = vunpack.c.h.b16 %v688
        %v830 = vunpack.c.l.b16 %v689
        %v831 = vunpack.c.h.b16 %v689
        %v832 = vunpack.c.l.b16 %v690
        %v833 = vunpack.c.h.b16 %v690
        %v834 = vunpack.c.l.b16 %v691
        %v835 = vunpack.c.h.b16 %v691
        %v836 = vunpack.c.l.b16 %v692
        %v837 = vunpack.c.h.b16 %v692
        %v838 = vunpack.c.l.b16 %v693
        %v839 = vunpack.c.h.b16 %v693
        %v840 = vunpack.c.l.b16 %v694
        %v841 = vunpack.c.h.b16 %v694
        %v842 = vunpack.c.l.b16 %v695
        %v843 = vunpack.c.h.b16 %v695
        %v844 = vunpack.c.l.b16 %v696
        %v845 = vunpack.c.h.b16 %v696
        %v846 = vunpack.c.l.b16 %v697
        %v847 = vunpack.c.h.b16 %v697
        %v848 = vunpack.c.l.b16 %v698
        %v849 = vunpack.c.h.b16 %v698
        %v850 = vunpack.c.l.b16 %v699
        %v851 = vunpack.c.h.b16 %v699
        %v852 = vunpack.c.l.b16 %v700
        %v853 = vunpack.c.h.b16 %v700
        %v854 = vunpack.c.l.b16 %v701
        %v855 = vunpack.c.h.b16 %v701
        %v856 = vunpack.c.l.b16 %v702
        %v857 = vunpack.c.h.b16 %v702
        %v858 = vunpack.c.l.b16 %v703
        %v859 = vunpack.c.h.b16 %v703
        %v860 = vunpack.c.l.b16 %v704
        %v861 = vunpack.c.h.b16 %v704
        %v862 = vunpack.c.l.b16 %v705
        %v863 = vunpack.c.h.b16 %v705
        %v864 = vunpack.c.l.b16 %v706
        %v865 = vunpack.c.h.b16 %v706
        %v866 = vunpack.c.l.b16 %v707
        %v867 = vunpack.c.h.b16 %v707
        %v868 = vunpack.c.l.b16 %v708
        %v869 = vunpack.c.h.b16 %v708
        %v870 = vunpack.c.l.b16 %v709
        %v871 = vunpack.c.h.b16 %v709
        %v872 = vunpack.c.l.b16 %v710
        %v873 = vunpack.c.h.b16 %v710
        %v874 = vunpack.c.l.b16 %v711
        %v875 = vunpack.c.h.b16 %v711
        %v876 = vunpack.c.l.b16 %v712
        %v877 = vunpack.c.h.b16 %v712
        %v878 = vunpack.c.l.b16 %v713
        %v879 = vunpack.c.h.b16 %v713
        %v880 = vunpack.c.l.b16 %v714
        %v881 = vunpack.c.h.b16 %v714
        %v882 = vunpack.c.l.b16 %v715
        %v883 = vunpack.c.h.b16 %v715
        %v884 = vunpack.c.l.b16 %v716
        %v885 = vunpack.c.h.b16 %v716
        %v886 = vunpack.c.l.b16 %v717
        %v887 = vunpack.c.h.b16 %v717
        %v888 = vunpack.c.l.b16 %v718
        %v889 = vunpack.c.h.b16 %v718
        %v890 = vunpack.c.l.b16 %v719
        %v891 = vunpack.c.h.b16 %v719
        %v892 = vpack.c.b16 %v832, %v828
        %v893 = vpack.c.b16 %v833, %v829
        %v894 = vpack.c.b16 %v834, %v830
        %v895 = vpack.c.b16 %v835, %v831
        %v896 = vpack.c.b16 %v840, %v836
        %v897 = vpack.c.b16 %v841, %v837
        %v898 = vpack.c.b16 %v842, %v838
        %v899 = vpack.c.b16 %v843, %v839
        %v900 = vpack.c.b16 %v848, %v844
        %v901 = vpack.c.b16 %v849, %v845
        %v902 = vpack.c.b16 %v850, %v846
        %v903 = vpack.c.b16 %v851, %v847
        %v904 = vpack.c.b16 %v856, %v852
        %v905 = vpack.c.b16 %v857, %v853
        %v906 = vpack.c.b16 %v858, %v854
        %v907 = vpack.c.b16 %v859, %v855
        %v908 = vpack.c.b16 %v864, %v860
        %v909 = vpack.c.b16 %v865, %v861
        %v910 = vpack.c.b16 %v866, %v862
        %v911 = vpack.c.b16 %v867, %v863
        %v912 = vpack.c.b16 %v872, %v868
        %v913 = vpack.c.b16 %v873, %v869
        %v914 = vpack.c.b16 %v874, %v870
        %v915 = vpack.c.b16 %v875, %v871
        %v916 = vpack.c.b16 %v880, %v876
        %v917 = vpack.c.b16 %v881, %v877
        %v918 = vpack.c.b16 %v882, %v878
        %v919 = vpack.c.b16 %v883, %v879
        %v920 = vpack.c.b16 %v888, %v884
        %v921 = vpack.c.b16 %v889, %v885
        %v922 = vpack.c.b16 %v890, %v886
        %v923 = vpack.c.b16 %v891, %v887
        %v1020 = vunpack.c.l.b16 %v720
        %v1021 = vunpack.c.h.b16 %v720
        %v1022 = vunpack.c.l.b16 %v721
        %v1023 = vunpack.c.h.b16 %v721
        %v1024 = vunpack.c.l.b16 %v722
        %v1025 = vunpack.c.h.b16 %v722
        %v1026 = vunpack.c.l.b16 %v723
        %v1027 = vunpack.c.h.b16 %v723
        %v1028 = vunpack.c.l.b16 %v724
        %v1029 = vunpack.c.h.b16 %v724
        %v1030 = vunpack.c.l.b16 %v725
        %v1031 = vunpack.c.h.b16 %v725
        %v1032 = vunpack.c.l.b16 %v726
        %v1033 = vunpack.c.h.b16 %v726
        %v1034 = vunpack.c.l.b16 %v727
        %v1035 = vunpack.c.h.b16 %v727
        %v1036 = vunpack.c.l.b16 %v728
        %v1037 = vunpack.c.h.b16 %v728
        %v1038 = vunpack.c.l.b16 %v729
        %v1039 = vunpack.c.h.b16 %v729
        %v1040 = vunpack.c.l.b16 %v730
        %v1041 = vunpack.c.h.b16 %v730
        %v1042 = vunpack.c.l.b16 %v731
        %v1043 = vunpack.c.h.b16 %v731
        %v1044 = vunpack.c.l.b16 %v732
        %v1045 = vunpack.c.h.b16 %v732
        %v1046 = vunpack.c.l.b16 %v733
        %v1047 = vunpack.c.h.b16 %v733
        %v1048 = vunpack.c.l.b16 %v734
        %v1049 = vunpack.c.h.b16 %v734
        %v1050 = vunpack.c.l.b16 %v735
        %v1051 = vunpack.c.h.b16 %v735
        %v1052 = vunpack.c.l.b16 %v736
        %v1053 = vunpack.c.h.b16 %v736
        %v1054 = vunpack.c.l.b16 %v737
        %v1055 = vunpack.c.h.b16 %v737
        %v1056 = vunpack.c.l.b16 %v738
        %v1057 = vunpack.c.h.b16 %v738
        %v1058 = vunpack.c.l.b16 %v739
        %v1059 = vunpack.c.h.b16 %v739
        %v1060 = vunpack.c.l.b16 %v740
        %v1061 = vunpack.c.h.b16 %v740
        %v1062 = vunpack.c.l.b16 %v741
        %v1063 = vunpack.c.h.b16 %v741
        %v1064 = vunpack.c.l.b16 %v742
        %v1065 = vunpack.c.h.b16 %v742
        %v1066 = vunpack.c.l.b16 %v743
        %v1067 = vunpack.c.h.b16 %v743
        %v1068 = vunpack.c.l.b16 %v744
        %v1069 = vunpack.c.h.b16 %v744
        %v1070 = vunpack.c.l.b16 %v745
        %v1071 = vunpack.c.h.b16 %v745
        %v1072 = vunpack.c.l.b16 %v746
        %v1073 = vunpack.c.h.b16 %v746
        %v1074 = vunpack.c.l.b16 %v747
        %v1075 = vunpack.c.h.b16 %v747
        %v1076 = vunpack.c.l.b16 %v748
        %v1077 = vunpack.c.h.b16 %v748
        %v1078 = vunpack.c.l.b16 %v749
        %v1079 = vunpack.c.h.b16 %v749
        %v1080 = vunpack.c.l.b16 %v750
        %v1081 = vunpack.c.h.b16 %v750
        %v1082 = vunpack.c.l.b16 %v751
        %v1083 = vunpack.c.h.b16 %v751
        %v1084 = vunpack.c.l.b16 %v752
        %v1085 = vunpack.c.h.b16 %v752
        %v1086 = vunpack.c.l.b16 %v753
        %v1087 = vunpack.c.h.b16 %v753
        %v1088 = vunpack.c.l.b16 %v754
        %v1089 = vunpack.c.h.b16 %v754
        %v1090 = vunpack.c.l.b16 %v755
        %v1091 = vunpack.c.h.b16 %v755
        %v1092 = vunpack.c.l.b16 %v756
        %v1093 = vunpack.c.h.b16 %v756
        %v1094 = vunpack.c.l.b16 %v757
        %v1095 = vunpack.c.h.b16 %v757
        %v1096 = vunpack.c.l.b16 %v758
        %v1097 = vunpack.c.h.b16 %v758
        %v1098 = vunpack.c.l.b16 %v759
        %v1099 = vunpack.c.h.b16 %v759
        %v1100 = vunpack.c.l.b16 %v760
        %v1101 = vunpack.c.h.b16 %v760
        %v1102 = vunpack.c.l.b16 %v761
        %v1103 = vunpack.c.h.b16 %v761
        %v1104 = vunpack.c.l.b16 %v762
        %v1105 = vunpack.c.h.b16 %v762
        %v1106 = vunpack.c.l.b16 %v763
        %v1107 = vunpack.c.h.b16 %v763
        %v1108 = vunpack.c.l.b16 %v764
        %v1109 = vunpack.c.h.b16 %v764
        %v1110 = vunpack.c.l.b16 %v765
        %v1111 = vunpack.c.h.b16 %v765
        %v1112 = vunpack.c.l.b16 %v766
        %v1113 = vunpack.c.h.b16 %v766
        %v1114 = vunpack.c.l.b16 %v767
        %v1115 = vunpack.c.h.b16 %v767
        %v1116 = vunpack.c.l.b16 %v768
        %v1117 = vunpack.c.h.b16 %v768
        %v1118 = vunpack.c.l.b16 %v769
        %v1119 = vunpack.c.h.b16 %v769
        %v1120 = vunpack.c.l.b16 %v770
        %v1121 = vunpack.c.h.b16 %v770
        %v1122 = vunpack.c.l.b16 %v771
        %v1123 = vunpack.c.h.b16 %v771
        %v1124 = vunpack.c.l.b16 %v772
        %v1125 = vunpack.c.h.b16 %v772
        %v1126 = vunpack.c.l.b16 %v773
        %v1127 = vunpack.c.h.b16 %v773
        %v1128 = vunpack.c.l.b16 %v774
        %v1129 = vunpack.c.h.b16 %v774
        %v1130 = vunpack.c.l.b16 %v775
        %v1131 = vunpack.c.h.b16 %v775
        %v1132 = vunpack.c.l.b16 %v776
        %v1133 = vunpack.c.h.b16 %v776
        %v1134 = vunpack.c.l.b16 %v777
        %v1135 = vunpack.c.h.b16 %v777
        %v1136 = vunpack.c.l.b16 %v778
        %v1137 = vunpack.c.h.b16 %v778
        %v1138 = vunpack.c.l.b16 %v779
        %v1139 = vunpack.c.h.b16 %v779
        %v1140 = vunpack.c.l.b16 %v780
        %v1141 = vunpack.c.h.b16 %v780
        %v1142 = vunpack.c.l.b16 %v781
        %v1143 = vunpack.c.h.b16 %v781
        %v1144 = vunpack.c.l.b16 %v782
        %v1145 = vunpack.c.h.b16 %v782
        %v1146 = vunpack.c.l.b16 %v783
        %v1147 = vunpack.c.h.b16 %v783
        %v1148 = vpack.c.b16 %v1022, %v1020
        %v1149 = vpack.c.b16 %v1023, %v1021
        %v1150 = vpack.c.b16 %v1026, %v1024
        %v1151 = vpack.c.b16 %v1027, %v1025
        %v1152 = vpack.c.b16 %v1030, %v1028
        %v1153 = vpack.c.b16 %v1031, %v1029
        %v1154 = vpack.c.b16 %v1034, %v1032
        %v1155 = vpack.c.b16 %v1035, %v1033
        %v1156 = vpack.c.b16 %v1038, %v1036
        %v1157 = vpack.c.b16 %v1039, %v1037
        %v1158 = vpack.c.b16 %v1042, %v1040
        %v1159 = vpack.c.b16 %v1043, %v1041
        %v1160 = vpack.c.b16 %v1046, %v1044
        %v1161 = vpack.c.b16 %v1047, %v1045
        %v1162 = vpack.c.b16 %v1050, %v1048
        %v1163 = vpack.c.b16 %v1051, %v1049
        %v1164 = vpack.c.b16 %v1054, %v1052
        %v1165 = vpack.c.b16 %v1055, %v1053
        %v1166 = vpack.c.b16 %v1058, %v1056
        %v1167 = vpack.c.b16 %v1059, %v1057
        %v1168 = vpack.c.b16 %v1062, %v1060
        %v1169 = vpack.c.b16 %v1063, %v1061
        %v1170 = vpack.c.b16 %v1066, %v1064
        %v1171 = vpack.c.b16 %v1067, %v1065
        %v1172 = vpack.c.b16 %v1070, %v1068
        %v1173 = vpack.c.b16 %v1071, %v1069
        %v1174 = vpack.c.b16 %v1074, %v1072
        %v1175 = vpack.c.b16 %v1075, %v1073
        %v1176 = vpack.c.b16 %v1078, %v1076
        %v1177 = vpack.c.b16 %v1079, %v1077
        %v1178 = vpack.c.b16 %v1082, %v1080
        %v1179 = vpack.c.b16 %v1083, %v1081
        %v1180 = vpack.c.b16 %v1086, %v1084
        %v1181 = vpack.c.b16 %v1087, %v1085
        %v1182 = vpack.c.b16 %v1090, %v1088
        %v1183 = vpack.c.b16 %v1091, %v1089
        %v1184 = vpack.c.b16 %v1094, %v1092
        %v1185 = vpack.c.b16 %v1095, %v1093
        %v1186 = vpack.c.b16 %v1098, %v1096
        %v1187 = vpack.c.b16 %v1099, %v1097
        %v1188 = vpack.c.b16 %v1102, %v1100
        %v1189 = vpack.c.b16 %v1103, %v1101
        %v1190 = vpack.c.b16 %v1106, %v1104
        %v1191 = vpack.c.b16 %v1107, %v1105
        %v1192 = vpack.c.b16 %v1110, %v1108
        %v1193 = vpack.c.b16 %v1111, %v1109
        %v1194 = vpack.c.b16 %v1114, %v1112
        %v1195 = vpack.c.b16 %v1115, %v1113
        %v1196 = vpack.c.b16 %v1118, %v1116
        %v1197 = vpack.c.b16 %v1119, %v1117
        %v1198 = vpack.c.b16 %v1122, %v1120
        %v1199 = vpack.c.b16 %v1123, %v1121
        %v1200 = vpack.c.b16 %v1126, %v1124
        %v1201 = vpack.c.b16 %v1127, %v1125
        %v1202 = vpack.c.b16 %v1130, %v1128
        %v1203 = vpack.c.b16 %v1131, %v1129
        %v1204 = vpack.c.b16 %v1134, %v1132
        %v1205 = vpack.c.b16 %v1135, %v1133
        %v1206 = vpack.c.b16 %v1138, %v1136
        %v1207 = vpack.c.b16 %v1139, %v1137
        %v1208 = vpack.c.b16 %v1142, %v1140
        %v1209 = vpack.c.b16 %v1143, %v1141
        %v1210 = vpack.c.b16 %v1146, %v1144
        %v1211 = vpack.c.b16 %v1147, %v1145
        %1276 = vmatprep.subr.bf16.mxu0 %v1163
        %1277 = vmatpush1.bf16.msra.mxu0 %v1162
        %1278 = vmatprep.subr.bf16.mxu0 %v1161
        %1279 = vmatpush1.bf16.msra.mxu0 %v1160
        %1280 = vmatprep.subr.bf16.mxu0 %v1159
        %1281 = vmatpush1.bf16.msra.mxu0 %v1158
        %1282 = vmatprep.subr.bf16.mxu0 %v1157
        %1283 = vmatpush1.bf16.msra.mxu0 %v1156
        %1284 = vmatprep.subr.bf16.mxu0 %v1155
        %1285 = vmatpush1.bf16.msra.mxu0 %v1154
        %1286 = vmatprep.subr.bf16.mxu0 %v1153
        %1287 = vmatpush1.bf16.msra.mxu0 %v1152
        %1288 = vmatprep.subr.bf16.mxu0 %v1151
        %1289 = vmatpush1.bf16.msra.mxu0 %v1150
        %1290 = vmatprep.subr.bf16.mxu0 %v1149
        %1291 = vmatpush1.bf16.msra.mxu0 %v1148
        %1292 = vmatprep.subr.bf16.mxu0 %v1179
        %1293 = vmatpush2.bf16.msra.mxu0 %v1178
        %1294 = vmatprep.subr.bf16.mxu0 %v1177
        %1295 = vmatpush2.bf16.msra.mxu0 %v1176
        %1296 = vmatprep.subr.bf16.mxu0 %v1175
        %1297 = vmatpush2.bf16.msra.mxu0 %v1174
        %1298 = vmatprep.subr.bf16.mxu0 %v1173
        %1299 = vmatpush2.bf16.msra.mxu0 %v1172
        %1300 = vmatprep.subr.bf16.mxu0 %v1171
        %1301 = vmatpush2.bf16.msra.mxu0 %v1170
        %1302 = vmatprep.subr.bf16.mxu0 %v1169
        %1303 = vmatpush2.bf16.msra.mxu0 %v1168
        %1304 = vmatprep.subr.bf16.mxu0 %v1167
        %1305 = vmatpush2.bf16.msra.mxu0 %v1166
        %1306 = vmatprep.subr.bf16.mxu0 %v1165
        %1307 = vmatpush2.bf16.msra.mxu0 %v1164
        %1308 = vmatprep.mubr.bf16.mxu0 %v893
        %1309 = vmatmul.mubr.bf16.gmra.mxu0 %v892
        %v1310 = vpop.f32.mrf.mxu0
        %v1311 = vadd.f32 %v789, %v1310
        %v1312 = vpop.f32.mrf.mxu0
        %v1313 = vadd.f32 %v793, %v1312
        %v1314 = vpop.f32.mrf.mxu0
        %v1315 = vadd.f32 %v789, %v1314
        %v1316 = vpop.f32.mrf.mxu0
        %v1317 = vadd.f32 %v793, %v1316
        %1318 = vmatprep.mubr.bf16.mxu0 %v897
        %1319 = vmatmul.mubr.bf16.gmra.mxu0 %v896
        %v1320 = vpop.f32.mrf.mxu0
        %v1321 = vadd.f32 %v789, %v1320
        %v1322 = vpop.f32.mrf.mxu0
        %v1323 = vadd.f32 %v793, %v1322
        %v1324 = vpop.f32.mrf.mxu0
        %v1325 = vadd.f32 %v789, %v1324
        %v1326 = vpop.f32.mrf.mxu0
        %v1327 = vadd.f32 %v793, %v1326
        %1328 = vmatprep.mubr.bf16.mxu0 %v901
        %1329 = vmatmul.mubr.bf16.gmra.mxu0 %v900
        %v1330 = vpop.f32.mrf.mxu0
        %v1331 = vadd.f32 %v789, %v1330
        %v1332 = vpop.f32.mrf.mxu0
        %v1333 = vadd.f32 %v793, %v1332
        %v1334 = vpop.f32.mrf.mxu0
        %v1335 = vadd.f32 %v789, %v1334
        %v1336 = vpop.f32.mrf.mxu0
        %v1337 = vadd.f32 %v793, %v1336
        %1338 = vmatprep.mubr.bf16.mxu0 %v905
        %1339 = vmatmul.mubr.bf16.gmra.mxu0 %v904
        %v1340 = vpop.f32.mrf.mxu0
        %v1341 = vadd.f32 %v789, %v1340
        %v1342 = vpop.f32.mrf.mxu0
        %v1343 = vadd.f32 %v793, %v1342
        %v1344 = vpop.f32.mrf.mxu0
        %v1345 = vadd.f32 %v789, %v1344
        %v1346 = vpop.f32.mrf.mxu0
        %v1347 = vadd.f32 %v793, %v1346
        %1348 = vmatprep.mubr.bf16.mxu0 %v909
        %1349 = vmatmul.mubr.bf16.gmra.mxu0 %v908
        %v1350 = vpop.f32.mrf.mxu0
        %v1351 = vadd.f32 %v789, %v1350
        %v1352 = vpop.f32.mrf.mxu0
        %v1353 = vadd.f32 %v793, %v1352
        %v1354 = vpop.f32.mrf.mxu0
        %v1355 = vadd.f32 %v789, %v1354
        %v1356 = vpop.f32.mrf.mxu0
        %v1357 = vadd.f32 %v793, %v1356
        %1358 = vmatprep.mubr.bf16.mxu0 %v913
        %1359 = vmatmul.mubr.bf16.gmra.mxu0 %v912
        %v1360 = vpop.f32.mrf.mxu0
        %v1361 = vadd.f32 %v789, %v1360
        %v1362 = vpop.f32.mrf.mxu0
        %v1363 = vadd.f32 %v793, %v1362
        %v1364 = vpop.f32.mrf.mxu0
        %v1365 = vadd.f32 %v789, %v1364
        %v1366 = vpop.f32.mrf.mxu0
        %v1367 = vadd.f32 %v793, %v1366
        %1368 = vmatprep.mubr.bf16.mxu0 %v917
        %1369 = vmatmul.mubr.bf16.gmra.mxu0 %v916
        %v1370 = vpop.f32.mrf.mxu0
        %v1371 = vadd.f32 %v789, %v1370
        %v1372 = vpop.f32.mrf.mxu0
        %v1373 = vadd.f32 %v793, %v1372
        %v1374 = vpop.f32.mrf.mxu0
        %v1375 = vadd.f32 %v789, %v1374
        %v1376 = vpop.f32.mrf.mxu0
        %v1377 = vadd.f32 %v793, %v1376
        %1378 = vmatprep.mubr.bf16.mxu0 %v921
        %1379 = vmatmul.mubr.bf16.gmra.mxu0 %v920
        %v1380 = vpop.f32.mrf.mxu0
        %v1381 = vadd.f32 %v789, %v1380
        %v1382 = vpop.f32.mrf.mxu0
        %v1383 = vadd.f32 %v793, %v1382
        %v1384 = vpop.f32.mrf.mxu0
        %v1385 = vadd.f32 %v789, %v1384
        %v1386 = vpop.f32.mrf.mxu0
        %v1387 = vadd.f32 %v793, %v1386
        %1388 = vdwg.mxu0
        %1389 = vmatprep.subr.bf16.mxu0 %v1195
        %1390 = vmatpush1.bf16.msra.mxu0 %v1194
        %1391 = vmatprep.subr.bf16.mxu0 %v1193
        %1392 = vmatpush1.bf16.msra.mxu0 %v1192
        %1393 = vmatprep.subr.bf16.mxu0 %v1191
        %1394 = vmatpush1.bf16.msra.mxu0 %v1190
        %1395 = vmatprep.subr.bf16.mxu0 %v1189
        %1396 = vmatpush1.bf16.msra.mxu0 %v1188
        %1397 = vmatprep.subr.bf16.mxu0 %v1187
        %1398 = vmatpush1.bf16.msra.mxu0 %v1186
        %1399 = vmatprep.subr.bf16.mxu0 %v1185
        %1400 = vmatpush1.bf16.msra.mxu0 %v1184
        %1401 = vmatprep.subr.bf16.mxu0 %v1183
        %1402 = vmatpush1.bf16.msra.mxu0 %v1182
        %1403 = vmatprep.subr.bf16.mxu0 %v1181
        %1404 = vmatpush1.bf16.msra.mxu0 %v1180
        %1405 = vmatprep.subr.bf16.mxu0 %v1211
        %1406 = vmatpush2.bf16.msra.mxu0 %v1210
        %1407 = vmatprep.subr.bf16.mxu0 %v1209
        %1408 = vmatpush2.bf16.msra.mxu0 %v1208
        %1409 = vmatprep.subr.bf16.mxu0 %v1207
        %1410 = vmatpush2.bf16.msra.mxu0 %v1206
        %1411 = vmatprep.subr.bf16.mxu0 %v1205
        %1412 = vmatpush2.bf16.msra.mxu0 %v1204
        %1413 = vmatprep.subr.bf16.mxu0 %v1203
        %1414 = vmatpush2.bf16.msra.mxu0 %v1202
        %1415 = vmatprep.subr.bf16.mxu0 %v1201
        %1416 = vmatpush2.bf16.msra.mxu0 %v1200
        %1417 = vmatprep.subr.bf16.mxu0 %v1199
        %1418 = vmatpush2.bf16.msra.mxu0 %v1198
        %1419 = vmatprep.subr.bf16.mxu0 %v1197
        %1420 = vmatpush2.bf16.msra.mxu0 %v1196
        %1421 = vmatprep.mubr.bf16.mxu0 %v895
        %1422 = vmatmul.mubr.bf16.gmra.mxu0 %v894
        %v1423 = vpop.f32.mrf.mxu0
        %v1424 = vadd.f32 %v1311, %v1423
        %v1425 = vpop.f32.mrf.mxu0
        %v1426 = vadd.f32 %v1313, %v1425
        %v1427 = vpop.f32.mrf.mxu0
        %v1428 = vadd.f32 %v1315, %v1427
        %v1429 = vpop.f32.mrf.mxu0
        %v1430 = vadd.f32 %v1317, %v1429
        %1431 = vmatprep.mubr.bf16.mxu0 %v899
        %1432 = vmatmul.mubr.bf16.gmra.mxu0 %v898
        %v1433 = vpop.f32.mrf.mxu0
        %v1434 = vadd.f32 %v1321, %v1433
        %v1435 = vpop.f32.mrf.mxu0
        %v1436 = vadd.f32 %v1323, %v1435
        %v1437 = vpop.f32.mrf.mxu0
        %v1438 = vadd.f32 %v1325, %v1437
        %v1439 = vpop.f32.mrf.mxu0
        %v1440 = vadd.f32 %v1327, %v1439
        %1441 = vmatprep.mubr.bf16.mxu0 %v903
        %1442 = vmatmul.mubr.bf16.gmra.mxu0 %v902
        %v1443 = vpop.f32.mrf.mxu0
        %v1444 = vadd.f32 %v1331, %v1443
        %v1445 = vpop.f32.mrf.mxu0
        %v1446 = vadd.f32 %v1333, %v1445
        %v1447 = vpop.f32.mrf.mxu0
        %v1448 = vadd.f32 %v1335, %v1447
        %v1449 = vpop.f32.mrf.mxu0
        %v1450 = vadd.f32 %v1337, %v1449
        %1451 = vmatprep.mubr.bf16.mxu0 %v907
        %1452 = vmatmul.mubr.bf16.gmra.mxu0 %v906
        %v1453 = vpop.f32.mrf.mxu0
        %v1454 = vadd.f32 %v1341, %v1453
        %v1455 = vpop.f32.mrf.mxu0
        %v1456 = vadd.f32 %v1343, %v1455
        %v1457 = vpop.f32.mrf.mxu0
        %v1458 = vadd.f32 %v1345, %v1457
        %v1459 = vpop.f32.mrf.mxu0
        %v1460 = vadd.f32 %v1347, %v1459
        %1461 = vmatprep.mubr.bf16.mxu0 %v911
        %1462 = vmatmul.mubr.bf16.gmra.mxu0 %v910
        %v1463 = vpop.f32.mrf.mxu0
        %v1464 = vadd.f32 %v1351, %v1463
        %v1465 = vpop.f32.mrf.mxu0
        %v1466 = vadd.f32 %v1353, %v1465
        %v1467 = vpop.f32.mrf.mxu0
        %v1468 = vadd.f32 %v1355, %v1467
        %v1469 = vpop.f32.mrf.mxu0
        %v1470 = vadd.f32 %v1357, %v1469
        %1471 = vmatprep.mubr.bf16.mxu0 %v915
        %1472 = vmatmul.mubr.bf16.gmra.mxu0 %v914
        %v1473 = vpop.f32.mrf.mxu0
        %v1474 = vadd.f32 %v1361, %v1473
        %v1475 = vpop.f32.mrf.mxu0
        %v1476 = vadd.f32 %v1363, %v1475
        %v1477 = vpop.f32.mrf.mxu0
        %v1478 = vadd.f32 %v1365, %v1477
        %v1479 = vpop.f32.mrf.mxu0
        %v1480 = vadd.f32 %v1367, %v1479
        %1481 = vmatprep.mubr.bf16.mxu0 %v919
        %1482 = vmatmul.mubr.bf16.gmra.mxu0 %v918
        %v1483 = vpop.f32.mrf.mxu0
        %v1484 = vadd.f32 %v1371, %v1483
        %v1485 = vpop.f32.mrf.mxu0
        %v1486 = vadd.f32 %v1373, %v1485
        %v1487 = vpop.f32.mrf.mxu0
        %v1488 = vadd.f32 %v1375, %v1487
        %v1489 = vpop.f32.mrf.mxu0
        %v1490 = vadd.f32 %v1377, %v1489
        %1491 = vmatprep.mubr.bf16.mxu0 %v923
        %1492 = vmatmul.mubr.bf16.gmra.mxu0 %v922
        %v1493 = vpop.f32.mrf.mxu0
        %v1494 = vadd.f32 %v1381, %v1493
        %v1495 = vpop.f32.mrf.mxu0
        %v1496 = vadd.f32 %v1383, %v1495
        %v1497 = vpop.f32.mrf.mxu0
        %v1498 = vadd.f32 %v1385, %v1497
        %v1499 = vpop.f32.mrf.mxu0
        %v1500 = vadd.f32 %v1387, %v1499
        %1501 = vdwg.mxu0
        %v1502 = vmax.f32 %v1424, 0.0
        %v1503 = vmax.f32 %v1426, 0.0
        %v1504 = vmax.f32 %v1428, 0.0
        %v1505 = vmax.f32 %v1430, 0.0
        %v1506 = vmax.f32 %v1434, 0.0
        %v1507 = vmax.f32 %v1436, 0.0
        %v1508 = vmax.f32 %v1438, 0.0
        %v1509 = vmax.f32 %v1440, 0.0
        %v1510 = vmax.f32 %v1444, 0.0
        %v1511 = vmax.f32 %v1446, 0.0
        %v1512 = vmax.f32 %v1448, 0.0
        %v1513 = vmax.f32 %v1450, 0.0
        %v1514 = vmax.f32 %v1454, 0.0
        %v1515 = vmax.f32 %v1456, 0.0
        %v1516 = vmax.f32 %v1458, 0.0
        %v1517 = vmax.f32 %v1460, 0.0
        %v1518 = vmax.f32 %v1464, 0.0
        %v1519 = vmax.f32 %v1466, 0.0
        %v1520 = vmax.f32 %v1468, 0.0
        %v1521 = vmax.f32 %v1470, 0.0
        %v1522 = vmax.f32 %v1474, 0.0
        %v1523 = vmax.f32 %v1476, 0.0
        %v1524 = vmax.f32 %v1478, 0.0
        %v1525 = vmax.f32 %v1480, 0.0
        %v1526 = vmax.f32 %v1484, 0.0
        %v1527 = vmax.f32 %v1486, 0.0
        %v1528 = vmax.f32 %v1488, 0.0
        %v1529 = vmax.f32 %v1490, 0.0
        %v1530 = vmax.f32 %v1494, 0.0
        %v1531 = vmax.f32 %v1496, 0.0
        %v1532 = vmax.f32 %v1498, 0.0
        %v1533 = vmax.f32 %v1500, 0.0
        %v1534 = vld [vmem:[#allocation2] sm:$0xff]
        %v1535 = vld [vmem:[#allocation2 + $0x8] sm:$0xff]
        %v1536 = vld [vmem:[#allocation2 + $0x10] sm:$0xff]
        %v1537 = vld [vmem:[#allocation2 + $0x18] sm:$0xff]
        %v1538 = vld [vmem:[#allocation2 + $0x20] sm:$0xff]
        %v1539 = vld [vmem:[#allocation2 + $0x28] sm:$0xff]
        %v1540 = vld [vmem:[#allocation2 + $0x30] sm:$0xff]
        %v1541 = vld [vmem:[#allocation2 + $0x38] sm:$0xff]
        %v1542 = vld [vmem:[#allocation2 + $0x40] sm:$0xff]
        %v1543 = vld [vmem:[#allocation2 + $0x48] sm:$0xff]
        %v1544 = vld [vmem:[#allocation2 + $0x50] sm:$0xff]
        %v1545 = vld [vmem:[#allocation2 + $0x58] sm:$0xff]
        %v1546 = vld [vmem:[#allocation2 + $0x60] sm:$0xff]
        %v1547 = vld [vmem:[#allocation2 + $0x68] sm:$0xff]
        %v1548 = vld [vmem:[#allocation2 + $0x70] sm:$0xff]
        %v1549 = vld [vmem:[#allocation2 + $0x78] sm:$0xff]
        %v1550 = vld [vmem:[#allocation2 + $0x80] sm:$0xff]
        %v1551 = vld [vmem:[#allocation2 + $0x88] sm:$0xff]
        %v1552 = vld [vmem:[#allocation2 + $0x90] sm:$0xff]
        %v1553 = vld [vmem:[#allocation2 + $0x98] sm:$0xff]
        %v1554 = vld [vmem:[#allocation2 + $0xa0] sm:$0xff]
        %v1555 = vld [vmem:[#allocation2 + $0xa8] sm:$0xff]
        %v1556 = vld [vmem:[#allocation2 + $0xb0] sm:$0xff]
        %v1557 = vld [vmem:[#allocation2 + $0xb8] sm:$0xff]
        %v1558 = vld [vmem:[#allocation2 + $0xc0] sm:$0xff]
        %v1559 = vld [vmem:[#allocation2 + $0xc8] sm:$0xff]
        %v1560 = vld [vmem:[#allocation2 + $0xd0] sm:$0xff]
        %v1561 = vld [vmem:[#allocation2 + $0xd8] sm:$0xff]
        %v1562 = vld [vmem:[#allocation2 + $0xe0] sm:$0xff]
        %v1563 = vld [vmem:[#allocation2 + $0xe8] sm:$0xff]
        %v1564 = vld [vmem:[#allocation2 + $0xf0] sm:$0xff]
        %v1565 = vld [vmem:[#allocation2 + $0xf8] sm:$0xff]
        %v1566 = vld [vmem:[#allocation2 + $0x100] sm:$0xff]
        %v1567 = vld [vmem:[#allocation2 + $0x108] sm:$0xff]
        %v1568 = vld [vmem:[#allocation2 + $0x110] sm:$0xff]
        %v1569 = vld [vmem:[#allocation2 + $0x118] sm:$0xff]
        %v1570 = vld [vmem:[#allocation2 + $0x120] sm:$0xff]
        %v1571 = vld [vmem:[#allocation2 + $0x128] sm:$0xff]
        %v1572 = vld [vmem:[#allocation2 + $0x130] sm:$0xff]
        %v1573 = vld [vmem:[#allocation2 + $0x138] sm:$0xff]
        %v1574 = vld [vmem:[#allocation2 + $0x140] sm:$0xff]
        %v1575 = vld [vmem:[#allocation2 + $0x148] sm:$0xff]
        %v1576 = vld [vmem:[#allocation2 + $0x150] sm:$0xff]
        %v1577 = vld [vmem:[#allocation2 + $0x158] sm:$0xff]
        %v1578 = vld [vmem:[#allocation2 + $0x160] sm:$0xff]
        %v1579 = vld [vmem:[#allocation2 + $0x168] sm:$0xff]
        %v1580 = vld [vmem:[#allocation2 + $0x170] sm:$0xff]
        %v1581 = vld [vmem:[#allocation2 + $0x178] sm:$0xff]
        %v1582 = vld [vmem:[#allocation2 + $0x180] sm:$0xff]
        %v1583 = vld [vmem:[#allocation2 + $0x188] sm:$0xff]
        %v1584 = vld [vmem:[#allocation2 + $0x190] sm:$0xff]
        %v1585 = vld [vmem:[#allocation2 + $0x198] sm:$0xff]
        %v1586 = vld [vmem:[#allocation2 + $0x1a0] sm:$0xff]
        %v1587 = vld [vmem:[#allocation2 + $0x1a8] sm:$0xff]
        %v1588 = vld [vmem:[#allocation2 + $0x1b0] sm:$0xff]
        %v1589 = vld [vmem:[#allocation2 + $0x1b8] sm:$0xff]
        %v1590 = vld [vmem:[#allocation2 + $0x1c0] sm:$0xff]
        %v1591 = vld [vmem:[#allocation2 + $0x1c8] sm:$0xff]
        %v1592 = vld [vmem:[#allocation2 + $0x1d0] sm:$0xff]
        %v1593 = vld [vmem:[#allocation2 + $0x1d8] sm:$0xff]
        %v1594 = vld [vmem:[#allocation2 + $0x1e0] sm:$0xff]
        %v1595 = vld [vmem:[#allocation2 + $0x1e8] sm:$0xff]
        %v1596 = vld [vmem:[#allocation2 + $0x1f0] sm:$0xff]
        %v1597 = vld [vmem:[#allocation2 + $0x1f8] sm:$0xff]
        %v1598 = vpack.c.bf16 %v1504, %v1502
        %v1599 = vpack.c.bf16 %v1505, %v1503
        %v1600 = vpack.c.bf16 %v1508, %v1506
        %v1601 = vpack.c.bf16 %v1509, %v1507
        %v1602 = vpack.c.bf16 %v1512, %v1510
        %v1603 = vpack.c.bf16 %v1513, %v1511
        %v1604 = vpack.c.bf16 %v1516, %v1514
        %v1605 = vpack.c.bf16 %v1517, %v1515
        %v1606 = vpack.c.bf16 %v1520, %v1518
        %v1607 = vpack.c.bf16 %v1521, %v1519
        %v1608 = vpack.c.bf16 %v1524, %v1522
        %v1609 = vpack.c.bf16 %v1525, %v1523
        %v1610 = vpack.c.bf16 %v1528, %v1526
        %v1611 = vpack.c.bf16 %v1529, %v1527
        %v1612 = vpack.c.bf16 %v1532, %v1530
        %v1613 = vpack.c.bf16 %v1533, %v1531
        %v1614 = vld [vmem:[%s589] sm:$0xff]
        %v1615 = vld [vmem:[%s589 + $0x8] sm:$0xff]
        %v1616 = vld [vmem:[%s589 + $0x10] sm:$0xff]
        %v1617 = vld [vmem:[%s589 + $0x18] sm:$0xff]
        %v1618 = vld [vmem:[%s589 + $0x20] sm:$0xff]
        %v1619 = vld [vmem:[%s589 + $0x28] sm:$0xff]
        %v1620 = vld [vmem:[%s589 + $0x30] sm:$0xff]
        %v1621 = vld [vmem:[%s589 + $0x38] sm:$0xff]
        %v1622 = vld [vmem:[%s589 + $0x40] sm:$0xff]
        %v1623 = vld [vmem:[%s589 + $0x48] sm:$0xff]
        %v1624 = vld [vmem:[%s589 + $0x50] sm:$0xff]
        %v1625 = vld [vmem:[%s589 + $0x58] sm:$0xff]
        %v1626 = vld [vmem:[%s589 + $0x60] sm:$0xff]
        %v1627 = vld [vmem:[%s589 + $0x68] sm:$0xff]
        %v1628 = vld [vmem:[%s589 + $0x70] sm:$0xff]
        %v1629 = vld [vmem:[%s589 + $0x78] sm:$0xff]
        %v1630 = vld [vmem:[%s589 + $0x80] sm:$0xff]
        %v1631 = vld [vmem:[%s589 + $0x88] sm:$0xff]
        %v1632 = vld [vmem:[%s589 + $0x90] sm:$0xff]
        %v1633 = vld [vmem:[%s589 + $0x98] sm:$0xff]
        %v1634 = vld [vmem:[%s589 + $0xa0] sm:$0xff]
        %v1635 = vld [vmem:[%s589 + $0xa8] sm:$0xff]
        %v1636 = vld [vmem:[%s589 + $0xb0] sm:$0xff]
        %v1637 = vld [vmem:[%s589 + $0xb8] sm:$0xff]
        %v1638 = vld [vmem:[%s589 + $0xc0] sm:$0xff]
        %v1639 = vld [vmem:[%s589 + $0xc8] sm:$0xff]
        %v1640 = vld [vmem:[%s589 + $0xd0] sm:$0xff]
        %v1641 = vld [vmem:[%s589 + $0xd8] sm:$0xff]
        %v1642 = vld [vmem:[%s589 + $0xe0] sm:$0xff]
        %v1643 = vld [vmem:[%s589 + $0xe8] sm:$0xff]
        %v1644 = vld [vmem:[%s589 + $0xf0] sm:$0xff]
        %v1645 = vld [vmem:[%s589 + $0xf8] sm:$0xff]
        %v1646 = vld [vmem:[%s589 + $0x100] sm:$0xff]
        %v1647 = vld [vmem:[%s589 + $0x108] sm:$0xff]
        %v1648 = vld [vmem:[%s589 + $0x110] sm:$0xff]
        %v1649 = vld [vmem:[%s589 + $0x118] sm:$0xff]
        %v1650 = vld [vmem:[%s589 + $0x120] sm:$0xff]
        %v1651 = vld [vmem:[%s589 + $0x128] sm:$0xff]
        %v1652 = vld [vmem:[%s589 + $0x130] sm:$0xff]
        %v1653 = vld [vmem:[%s589 + $0x138] sm:$0xff]
        %v1654 = vld [vmem:[%s589 + $0x140] sm:$0xff]
        %v1655 = vld [vmem:[%s589 + $0x148] sm:$0xff]
        %v1656 = vld [vmem:[%s589 + $0x150] sm:$0xff]
        %v1657 = vld [vmem:[%s589 + $0x158] sm:$0xff]
        %v1658 = vld [vmem:[%s589 + $0x160] sm:$0xff]
        %v1659 = vld [vmem:[%s589 + $0x168] sm:$0xff]
        %v1660 = vld [vmem:[%s589 + $0x170] sm:$0xff]
        %v1661 = vld [vmem:[%s589 + $0x178] sm:$0xff]
        %v1662 = vld [vmem:[%s589 + $0x180] sm:$0xff]
        %v1663 = vld [vmem:[%s589 + $0x188] sm:$0xff]
        %v1664 = vld [vmem:[%s589 + $0x190] sm:$0xff]
        %v1665 = vld [vmem:[%s589 + $0x198] sm:$0xff]
        %v1666 = vld [vmem:[%s589 + $0x1a0] sm:$0xff]
        %v1667 = vld [vmem:[%s589 + $0x1a8] sm:$0xff]
        %v1668 = vld [vmem:[%s589 + $0x1b0] sm:$0xff]
        %v1669 = vld [vmem:[%s589 + $0x1b8] sm:$0xff]
        %v1670 = vld [vmem:[%s589 + $0x1c0] sm:$0xff]
        %v1671 = vld [vmem:[%s589 + $0x1c8] sm:$0xff]
        %v1672 = vld [vmem:[%s589 + $0x1d0] sm:$0xff]
        %v1673 = vld [vmem:[%s589 + $0x1d8] sm:$0xff]
        %v1674 = vld [vmem:[%s589 + $0x1e0] sm:$0xff]
        %v1675 = vld [vmem:[%s589 + $0x1e8] sm:$0xff]
        %v1676 = vld [vmem:[%s589 + $0x1f0] sm:$0xff]
        %v1677 = vld [vmem:[%s589 + $0x1f8] sm:$0xff]
        %v1742 = vunpack.c.l.b16 %v1614
        %v1743 = vunpack.c.h.b16 %v1614
        %v1744 = vunpack.c.l.b16 %v1615
        %v1745 = vunpack.c.h.b16 %v1615
        %v1746 = vunpack.c.l.b16 %v1616
        %v1747 = vunpack.c.h.b16 %v1616
        %v1748 = vunpack.c.l.b16 %v1617
        %v1749 = vunpack.c.h.b16 %v1617
        %v1750 = vunpack.c.l.b16 %v1618
        %v1751 = vunpack.c.h.b16 %v1618
        %v1752 = vunpack.c.l.b16 %v1619
        %v1753 = vunpack.c.h.b16 %v1619
        %v1754 = vunpack.c.l.b16 %v1620
        %v1755 = vunpack.c.h.b16 %v1620
        %v1756 = vunpack.c.l.b16 %v1621
        %v1757 = vunpack.c.h.b16 %v1621
        %v1758 = vunpack.c.l.b16 %v1622
        %v1759 = vunpack.c.h.b16 %v1622
        %v1760 = vunpack.c.l.b16 %v1623
        %v1761 = vunpack.c.h.b16 %v1623
        %v1762 = vunpack.c.l.b16 %v1624
        %v1763 = vunpack.c.h.b16 %v1624
        %v1764 = vunpack.c.l.b16 %v1625
        %v1765 = vunpack.c.h.b16 %v1625
        %v1766 = vunpack.c.l.b16 %v1626
        %v1767 = vunpack.c.h.b16 %v1626
        %v1768 = vunpack.c.l.b16 %v1627
        %v1769 = vunpack.c.h.b16 %v1627
        %v1770 = vunpack.c.l.b16 %v1628
        %v1771 = vunpack.c.h.b16 %v1628
        %v1772 = vunpack.c.l.b16 %v1629
        %v1773 = vunpack.c.h.b16 %v1629
        %v1774 = vunpack.c.l.b16 %v1630
        %v1775 = vunpack.c.h.b16 %v1630
        %v1776 = vunpack.c.l.b16 %v1631
        %v1777 = vunpack.c.h.b16 %v1631
        %v1778 = vunpack.c.l.b16 %v1632
        %v1779 = vunpack.c.h.b16 %v1632
        %v1780 = vunpack.c.l.b16 %v1633
        %v1781 = vunpack.c.h.b16 %v1633
        %v1782 = vunpack.c.l.b16 %v1634
        %v1783 = vunpack.c.h.b16 %v1634
        %v1784 = vunpack.c.l.b16 %v1635
        %v1785 = vunpack.c.h.b16 %v1635
        %v1786 = vunpack.c.l.b16 %v1636
        %v1787 = vunpack.c.h.b16 %v1636
        %v1788 = vunpack.c.l.b16 %v1637
        %v1789 = vunpack.c.h.b16 %v1637
        %v1790 = vunpack.c.l.b16 %v1638
        %v1791 = vunpack.c.h.b16 %v1638
        %v1792 = vunpack.c.l.b16 %v1639
        %v1793 = vunpack.c.h.b16 %v1639
        %v1794 = vunpack.c.l.b16 %v1640
        %v1795 = vunpack.c.h.b16 %v1640
        %v1796 = vunpack.c.l.b16 %v1641
        %v1797 = vunpack.c.h.b16 %v1641
        %v1798 = vunpack.c.l.b16 %v1642
        %v1799 = vunpack.c.h.b16 %v1642
        %v1800 = vunpack.c.l.b16 %v1643
        %v1801 = vunpack.c.h.b16 %v1643
        %v1802 = vunpack.c.l.b16 %v1644
        %v1803 = vunpack.c.h.b16 %v1644
        %v1804 = vunpack.c.l.b16 %v1645
        %v1805 = vunpack.c.h.b16 %v1645
        %v1806 = vunpack.c.l.b16 %v1646
        %v1807 = vunpack.c.h.b16 %v1646
        %v1808 = vunpack.c.l.b16 %v1647
        %v1809 = vunpack.c.h.b16 %v1647
        %v1810 = vunpack.c.l.b16 %v1648
        %v1811 = vunpack.c.h.b16 %v1648
        %v1812 = vunpack.c.l.b16 %v1649
        %v1813 = vunpack.c.h.b16 %v1649
        %v1814 = vunpack.c.l.b16 %v1650
        %v1815 = vunpack.c.h.b16 %v1650
        %v1816 = vunpack.c.l.b16 %v1651
        %v1817 = vunpack.c.h.b16 %v1651
        %v1818 = vunpack.c.l.b16 %v1652
        %v1819 = vunpack.c.h.b16 %v1652
        %v1820 = vunpack.c.l.b16 %v1653
        %v1821 = vunpack.c.h.b16 %v1653
        %v1822 = vunpack.c.l.b16 %v1654
        %v1823 = vunpack.c.h.b16 %v1654
        %v1824 = vunpack.c.l.b16 %v1655
        %v1825 = vunpack.c.h.b16 %v1655
        %v1826 = vunpack.c.l.b16 %v1656
        %v1827 = vunpack.c.h.b16 %v1656
        %v1828 = vunpack.c.l.b16 %v1657
        %v1829 = vunpack.c.h.b16 %v1657
        %v1830 = vunpack.c.l.b16 %v1658
        %v1831 = vunpack.c.h.b16 %v1658
        %v1832 = vunpack.c.l.b16 %v1659
        %v1833 = vunpack.c.h.b16 %v1659
        %v1834 = vunpack.c.l.b16 %v1660
        %v1835 = vunpack.c.h.b16 %v1660
        %v1836 = vunpack.c.l.b16 %v1661
        %v1837 = vunpack.c.h.b16 %v1661
        %v1838 = vunpack.c.l.b16 %v1662
        %v1839 = vunpack.c.h.b16 %v1662
        %v1840 = vunpack.c.l.b16 %v1663
        %v1841 = vunpack.c.h.b16 %v1663
        %v1842 = vunpack.c.l.b16 %v1664
        %v1843 = vunpack.c.h.b16 %v1664
        %v1844 = vunpack.c.l.b16 %v1665
        %v1845 = vunpack.c.h.b16 %v1665
        %v1846 = vunpack.c.l.b16 %v1666
        %v1847 = vunpack.c.h.b16 %v1666
        %v1848 = vunpack.c.l.b16 %v1667
        %v1849 = vunpack.c.h.b16 %v1667
        %v1850 = vunpack.c.l.b16 %v1668
        %v1851 = vunpack.c.h.b16 %v1668
        %v1852 = vunpack.c.l.b16 %v1669
        %v1853 = vunpack.c.h.b16 %v1669
        %v1854 = vunpack.c.l.b16 %v1670
        %v1855 = vunpack.c.h.b16 %v1670
        %v1856 = vunpack.c.l.b16 %v1671
        %v1857 = vunpack.c.h.b16 %v1671
        %v1858 = vunpack.c.l.b16 %v1672
        %v1859 = vunpack.c.h.b16 %v1672
        %v1860 = vunpack.c.l.b16 %v1673
        %v1861 = vunpack.c.h.b16 %v1673
        %v1862 = vunpack.c.l.b16 %v1674
        %v1863 = vunpack.c.h.b16 %v1674
        %v1864 = vunpack.c.l.b16 %v1675
        %v1865 = vunpack.c.h.b16 %v1675
        %v1866 = vunpack.c.l.b16 %v1676
        %v1867 = vunpack.c.h.b16 %v1676
        %v1868 = vunpack.c.l.b16 %v1677
        %v1869 = vunpack.c.h.b16 %v1677
        %v1870 = vpack.c.b16 %v1746, %v1742
        %v1871 = vpack.c.b16 %v1747, %v1743
        %v1872 = vpack.c.b16 %v1748, %v1744
        %v1873 = vpack.c.b16 %v1749, %v1745
        %v1874 = vpack.c.b16 %v1754, %v1750
        %v1875 = vpack.c.b16 %v1755, %v1751
        %v1876 = vpack.c.b16 %v1756, %v1752
        %v1877 = vpack.c.b16 %v1757, %v1753
        %v1878 = vpack.c.b16 %v1762, %v1758
        %v1879 = vpack.c.b16 %v1763, %v1759
        %v1880 = vpack.c.b16 %v1764, %v1760
        %v1881 = vpack.c.b16 %v1765, %v1761
        %v1882 = vpack.c.b16 %v1770, %v1766
        %v1883 = vpack.c.b16 %v1771, %v1767
        %v1884 = vpack.c.b16 %v1772, %v1768
        %v1885 = vpack.c.b16 %v1773, %v1769
        %v1886 = vpack.c.b16 %v1778, %v1774
        %v1887 = vpack.c.b16 %v1779, %v1775
        %v1888 = vpack.c.b16 %v1780, %v1776
        %v1889 = vpack.c.b16 %v1781, %v1777
        %v1890 = vpack.c.b16 %v1786, %v1782
        %v1891 = vpack.c.b16 %v1787, %v1783
        %v1892 = vpack.c.b16 %v1788, %v1784
        %v1893 = vpack.c.b16 %v1789, %v1785
        %v1894 = vpack.c.b16 %v1794, %v1790
        %v1895 = vpack.c.b16 %v1795, %v1791
        %v1896 = vpack.c.b16 %v1796, %v1792
        %v1897 = vpack.c.b16 %v1797, %v1793
        %v1898 = vpack.c.b16 %v1802, %v1798
        %v1899 = vpack.c.b16 %v1803, %v1799
        %v1900 = vpack.c.b16 %v1804, %v1800
        %v1901 = vpack.c.b16 %v1805, %v1801
        %v1902 = vpack.c.b16 %v1810, %v1806
        %v1903 = vpack.c.b16 %v1811, %v1807
        %v1904 = vpack.c.b16 %v1812, %v1808
        %v1905 = vpack.c.b16 %v1813, %v1809
        %v1906 = vpack.c.b16 %v1818, %v1814
        %v1907 = vpack.c.b16 %v1819, %v1815
        %v1908 = vpack.c.b16 %v1820, %v1816
        %v1909 = vpack.c.b16 %v1821, %v1817
        %v1910 = vpack.c.b16 %v1826, %v1822
        %v1911 = vpack.c.b16 %v1827, %v1823
        %v1912 = vpack.c.b16 %v1828, %v1824
        %v1913 = vpack.c.b16 %v1829, %v1825
        %v1914 = vpack.c.b16 %v1834, %v1830
        %v1915 = vpack.c.b16 %v1835, %v1831
        %v1916 = vpack.c.b16 %v1836, %v1832
        %v1917 = vpack.c.b16 %v1837, %v1833
        %v1918 = vpack.c.b16 %v1842, %v1838
        %v1919 = vpack.c.b16 %v1843, %v1839
        %v1920 = vpack.c.b16 %v1844, %v1840
        %v1921 = vpack.c.b16 %v1845, %v1841
        %v1922 = vpack.c.b16 %v1850, %v1846
        %v1923 = vpack.c.b16 %v1851, %v1847
        %v1924 = vpack.c.b16 %v1852, %v1848
        %v1925 = vpack.c.b16 %v1853, %v1849
        %v1926 = vpack.c.b16 %v1858, %v1854
        %v1927 = vpack.c.b16 %v1859, %v1855
        %v1928 = vpack.c.b16 %v1860, %v1856
        %v1929 = vpack.c.b16 %v1861, %v1857
        %v1930 = vpack.c.b16 %v1866, %v1862
        %v1931 = vpack.c.b16 %v1867, %v1863
        %v1932 = vpack.c.b16 %v1868, %v1864
        %v1933 = vpack.c.b16 %v1869, %v1865
        %1998 = vmatprep.subr.bf16.mxu0 %v1899
        %1999 = vmatpush1.bf16.msra.mxu0 %v1898
        %2000 = vmatprep.subr.bf16.mxu0 %v1895
        %2001 = vmatpush1.bf16.msra.mxu0 %v1894
        %2002 = vmatprep.subr.bf16.mxu0 %v1891
        %2003 = vmatpush1.bf16.msra.mxu0 %v1890
        %2004 = vmatprep.subr.bf16.mxu0 %v1887
        %2005 = vmatpush1.bf16.msra.mxu0 %v1886
        %2006 = vmatprep.subr.bf16.mxu0 %v1883
        %2007 = vmatpush1.bf16.msra.mxu0 %v1882
        %2008 = vmatprep.subr.bf16.mxu0 %v1879
        %2009 = vmatpush1.bf16.msra.mxu0 %v1878
        %2010 = vmatprep.subr.bf16.mxu0 %v1875
        %2011 = vmatpush1.bf16.msra.mxu0 %v1874
        %2012 = vmatprep.subr.bf16.mxu0 %v1871
        %2013 = vmatpush1.bf16.msra.mxu0 %v1870
        %2014 = vmatprep.subr.bf16.mxu0 %v1931
        %2015 = vmatpush2.bf16.msra.mxu0 %v1930
        %2016 = vmatprep.subr.bf16.mxu0 %v1927
        %2017 = vmatpush2.bf16.msra.mxu0 %v1926
        %2018 = vmatprep.subr.bf16.mxu0 %v1923
        %2019 = vmatpush2.bf16.msra.mxu0 %v1922
        %2020 = vmatprep.subr.bf16.mxu0 %v1919
        %2021 = vmatpush2.bf16.msra.mxu0 %v1918
        %2022 = vmatprep.subr.bf16.mxu0 %v1915
        %2023 = vmatpush2.bf16.msra.mxu0 %v1914
        %2024 = vmatprep.subr.bf16.mxu0 %v1911
        %2025 = vmatpush2.bf16.msra.mxu0 %v1910
        %2026 = vmatprep.subr.bf16.mxu0 %v1907
        %2027 = vmatpush2.bf16.msra.mxu0 %v1906
        %2028 = vmatprep.subr.bf16.mxu0 %v1903
        %2029 = vmatpush2.bf16.msra.mxu0 %v1902
        %2030 = vmatprep.mubr.bf16.mxu0 %v1599
        %2031 = vmatmul.mubr.bf16.gmra.mxu0 %v1598
        %v2032 = vpop.f32.mrf.mxu0
        %v2033 = vadd.f32 0.0, %v2032
        %v2034 = vpop.f32.mrf.mxu0
        %v2035 = vadd.f32 0.0, %v2034
        %v2036 = vpop.f32.mrf.mxu0
        %v2037 = vadd.f32 0.0, %v2036
        %v2038 = vpop.f32.mrf.mxu0
        %v2039 = vadd.f32 0.0, %v2038
        %2040 = vmatprep.mubr.bf16.mxu0 %v1601
        %2041 = vmatmul.mubr.bf16.gmra.mxu0 %v1600
        %v2042 = vpop.f32.mrf.mxu0
        %v2043 = vadd.f32 0.0, %v2042
        %v2044 = vpop.f32.mrf.mxu0
        %v2045 = vadd.f32 0.0, %v2044
        %v2046 = vpop.f32.mrf.mxu0
        %v2047 = vadd.f32 0.0, %v2046
        %v2048 = vpop.f32.mrf.mxu0
        %v2049 = vadd.f32 0.0, %v2048
        %2050 = vmatprep.mubr.bf16.mxu0 %v1603
        %2051 = vmatmul.mubr.bf16.gmra.mxu0 %v1602
        %v2052 = vpop.f32.mrf.mxu0
        %v2053 = vadd.f32 0.0, %v2052
        %v2054 = vpop.f32.mrf.mxu0
        %v2055 = vadd.f32 0.0, %v2054
        %v2056 = vpop.f32.mrf.mxu0
        %v2057 = vadd.f32 0.0, %v2056
        %v2058 = vpop.f32.mrf.mxu0
        %v2059 = vadd.f32 0.0, %v2058
        %2060 = vmatprep.mubr.bf16.mxu0 %v1605
        %2061 = vmatmul.mubr.bf16.gmra.mxu0 %v1604
        %v2062 = vpop.f32.mrf.mxu0
        %v2063 = vadd.f32 0.0, %v2062
        %v2064 = vpop.f32.mrf.mxu0
        %v2065 = vadd.f32 0.0, %v2064
        %v2066 = vpop.f32.mrf.mxu0
        %v2067 = vadd.f32 0.0, %v2066
        %v2068 = vpop.f32.mrf.mxu0
        %v2069 = vadd.f32 0.0, %v2068
        %2070 = vmatprep.mubr.bf16.mxu0 %v1607
        %2071 = vmatmul.mubr.bf16.gmra.mxu0 %v1606
        %v2072 = vpop.f32.mrf.mxu0
        %v2073 = vadd.f32 0.0, %v2072
        %v2074 = vpop.f32.mrf.mxu0
        %v2075 = vadd.f32 0.0, %v2074
        %v2076 = vpop.f32.mrf.mxu0
        %v2077 = vadd.f32 0.0, %v2076
        %v2078 = vpop.f32.mrf.mxu0
        %v2079 = vadd.f32 0.0, %v2078
        %2080 = vmatprep.mubr.bf16.mxu0 %v1609
        %2081 = vmatmul.mubr.bf16.gmra.mxu0 %v1608
        %v2082 = vpop.f32.mrf.mxu0
        %v2083 = vadd.f32 0.0, %v2082
        %v2084 = vpop.f32.mrf.mxu0
        %v2085 = vadd.f32 0.0, %v2084
        %v2086 = vpop.f32.mrf.mxu0
        %v2087 = vadd.f32 0.0, %v2086
        %v2088 = vpop.f32.mrf.mxu0
        %v2089 = vadd.f32 0.0, %v2088
        %2090 = vmatprep.mubr.bf16.mxu0 %v1611
        %2091 = vmatmul.mubr.bf16.gmra.mxu0 %v1610
        %v2092 = vpop.f32.mrf.mxu0
        %v2093 = vadd.f32 0.0, %v2092
        %v2094 = vpop.f32.mrf.mxu0
        %v2095 = vadd.f32 0.0, %v2094
        %v2096 = vpop.f32.mrf.mxu0
        %v2097 = vadd.f32 0.0, %v2096
        %v2098 = vpop.f32.mrf.mxu0
        %v2099 = vadd.f32 0.0, %v2098
        %2100 = vmatprep.mubr.bf16.mxu0 %v1613
        %2101 = vmatmul.mubr.bf16.gmra.mxu0 %v1612
        %v2102 = vpop.f32.mrf.mxu0
        %v2103 = vadd.f32 0.0, %v2102
        %v2104 = vpop.f32.mrf.mxu0
        %v2105 = vadd.f32 0.0, %v2104
        %v2106 = vpop.f32.mrf.mxu0
        %v2107 = vadd.f32 0.0, %v2106
        %v2108 = vpop.f32.mrf.mxu0
        %v2109 = vadd.f32 0.0, %v2108
        %2110 = vdwg.mxu0
        %2111 = vmatprep.subr.bf16.mxu0 %v1901
        %2112 = vmatpush1.bf16.msra.mxu0 %v1900
        %2113 = vmatprep.subr.bf16.mxu0 %v1897
        %2114 = vmatpush1.bf16.msra.mxu0 %v1896
        %2115 = vmatprep.subr.bf16.mxu0 %v1893
        %2116 = vmatpush1.bf16.msra.mxu0 %v1892
        %2117 = vmatprep.subr.bf16.mxu0 %v1889
        %2118 = vmatpush1.bf16.msra.mxu0 %v1888
        %2119 = vmatprep.subr.bf16.mxu0 %v1885
        %2120 = vmatpush1.bf16.msra.mxu0 %v1884
        %2121 = vmatprep.subr.bf16.mxu0 %v1881
        %2122 = vmatpush1.bf16.msra.mxu0 %v1880
        %2123 = vmatprep.subr.bf16.mxu0 %v1877
        %2124 = vmatpush1.bf16.msra.mxu0 %v1876
        %2125 = vmatprep.subr.bf16.mxu0 %v1873
        %2126 = vmatpush1.bf16.msra.mxu0 %v1872
        %2127 = vmatprep.subr.bf16.mxu0 %v1933
        %2128 = vmatpush2.bf16.msra.mxu0 %v1932
        %2129 = vmatprep.subr.bf16.mxu0 %v1929
        %2130 = vmatpush2.bf16.msra.mxu0 %v1928
        %2131 = vmatprep.subr.bf16.mxu0 %v1925
        %2132 = vmatpush2.bf16.msra.mxu0 %v1924
        %2133 = vmatprep.subr.bf16.mxu0 %v1921
        %2134 = vmatpush2.bf16.msra.mxu0 %v1920
        %2135 = vmatprep.subr.bf16.mxu0 %v1917
        %2136 = vmatpush2.bf16.msra.mxu0 %v1916
        %2137 = vmatprep.subr.bf16.mxu0 %v1913
        %2138 = vmatpush2.bf16.msra.mxu0 %v1912
        %2139 = vmatprep.subr.bf16.mxu0 %v1909
        %2140 = vmatpush2.bf16.msra.mxu0 %v1908
        %2141 = vmatprep.subr.bf16.mxu0 %v1905
        %2142 = vmatpush2.bf16.msra.mxu0 %v1904
        %2143 = vmatprep.mubr.bf16.mxu0 %v1599
        %2144 = vmatmul.mubr.bf16.gmra.mxu0 %v1598
        %v2145 = vpop.f32.mrf.mxu0
        %v2146 = vadd.f32 0.0, %v2145
        %v2147 = vpop.f32.mrf.mxu0
        %v2148 = vadd.f32 0.0, %v2147
        %v2149 = vpop.f32.mrf.mxu0
        %v2150 = vadd.f32 0.0, %v2149
        %v2151 = vpop.f32.mrf.mxu0
        %v2152 = vadd.f32 0.0, %v2151
        %2153 = vmatprep.mubr.bf16.mxu0 %v1601
        %2154 = vmatmul.mubr.bf16.gmra.mxu0 %v1600
        %v2155 = vpop.f32.mrf.mxu0
        %v2156 = vadd.f32 0.0, %v2155
        %v2157 = vpop.f32.mrf.mxu0
        %v2158 = vadd.f32 0.0, %v2157
        %v2159 = vpop.f32.mrf.mxu0
        %v2160 = vadd.f32 0.0, %v2159
        %v2161 = vpop.f32.mrf.mxu0
        %v2162 = vadd.f32 0.0, %v2161
        %2163 = vmatprep.mubr.bf16.mxu0 %v1603
        %2164 = vmatmul.mubr.bf16.gmra.mxu0 %v1602
        %v2165 = vpop.f32.mrf.mxu0
        %v2166 = vadd.f32 0.0, %v2165
        %v2167 = vpop.f32.mrf.mxu0
        %v2168 = vadd.f32 0.0, %v2167
        %v2169 = vpop.f32.mrf.mxu0
        %v2170 = vadd.f32 0.0, %v2169
        %v2171 = vpop.f32.mrf.mxu0
        %v2172 = vadd.f32 0.0, %v2171
        %2173 = vmatprep.mubr.bf16.mxu0 %v1605
        %2174 = vmatmul.mubr.bf16.gmra.mxu0 %v1604
        %v2175 = vpop.f32.mrf.mxu0
        %v2176 = vadd.f32 0.0, %v2175
        %v2177 = vpop.f32.mrf.mxu0
        %v2178 = vadd.f32 0.0, %v2177
        %v2179 = vpop.f32.mrf.mxu0
        %v2180 = vadd.f32 0.0, %v2179
        %v2181 = vpop.f32.mrf.mxu0
        %v2182 = vadd.f32 0.0, %v2181
        %2183 = vmatprep.mubr.bf16.mxu0 %v1607
        %2184 = vmatmul.mubr.bf16.gmra.mxu0 %v1606
        %v2185 = vpop.f32.mrf.mxu0
        %v2186 = vadd.f32 0.0, %v2185
        %v2187 = vpop.f32.mrf.mxu0
        %v2188 = vadd.f32 0.0, %v2187
        %v2189 = vpop.f32.mrf.mxu0
        %v2190 = vadd.f32 0.0, %v2189
        %v2191 = vpop.f32.mrf.mxu0
        %v2192 = vadd.f32 0.0, %v2191
        %2193 = vmatprep.mubr.bf16.mxu0 %v1609
        %2194 = vmatmul.mubr.bf16.gmra.mxu0 %v1608
        %v2195 = vpop.f32.mrf.mxu0
        %v2196 = vadd.f32 0.0, %v2195
        %v2197 = vpop.f32.mrf.mxu0
        %v2198 = vadd.f32 0.0, %v2197
        %v2199 = vpop.f32.mrf.mxu0
        %v2200 = vadd.f32 0.0, %v2199
        %v2201 = vpop.f32.mrf.mxu0
        %v2202 = vadd.f32 0.0, %v2201
        %2203 = vmatprep.mubr.bf16.mxu0 %v1611
        %2204 = vmatmul.mubr.bf16.gmra.mxu0 %v1610
        %v2205 = vpop.f32.mrf.mxu0
        %v2206 = vadd.f32 0.0, %v2205
        %v2207 = vpop.f32.mrf.mxu0
        %v2208 = vadd.f32 0.0, %v2207
        %v2209 = vpop.f32.mrf.mxu0
        %v2210 = vadd.f32 0.0, %v2209
        %v2211 = vpop.f32.mrf.mxu0
        %v2212 = vadd.f32 0.0, %v2211
        %2213 = vmatprep.mubr.bf16.mxu0 %v1613
        %2214 = vmatmul.mubr.bf16.gmra.mxu0 %v1612
        %v2215 = vpop.f32.mrf.mxu0
        %v2216 = vadd.f32 0.0, %v2215
        %v2217 = vpop.f32.mrf.mxu0
        %v2218 = vadd.f32 0.0, %v2217
        %v2219 = vpop.f32.mrf.mxu0
        %v2220 = vadd.f32 0.0, %v2219
        %v2221 = vpop.f32.mrf.mxu0
        %v2222 = vadd.f32 0.0, %v2221
        %2223 = vdwg.mxu0
        %v2224 = vadd.f32 %v1534, %v2033
        %v2225 = vadd.f32 %v1535, %v2035
        %v2226 = vadd.f32 %v1536, %v2146
        %v2227 = vadd.f32 %v1537, %v2148
        %v2228 = vadd.f32 %v1538, %v2037
        %v2229 = vadd.f32 %v1539, %v2039
        %v2230 = vadd.f32 %v1540, %v2150
        %v2231 = vadd.f32 %v1541, %v2152
        %v2232 = vadd.f32 %v1542, %v2043
        %v2233 = vadd.f32 %v1543, %v2045
        %v2234 = vadd.f32 %v1544, %v2156
        %v2235 = vadd.f32 %v1545, %v2158
        %v2236 = vadd.f32 %v1546, %v2047
        %v2237 = vadd.f32 %v1547, %v2049
        %v2238 = vadd.f32 %v1548, %v2160
        %v2239 = vadd.f32 %v1549, %v2162
        %v2240 = vadd.f32 %v1550, %v2053
        %v2241 = vadd.f32 %v1551, %v2055
        %v2242 = vadd.f32 %v1552, %v2166
        %v2243 = vadd.f32 %v1553, %v2168
        %v2244 = vadd.f32 %v1554, %v2057
        %v2245 = vadd.f32 %v1555, %v2059
        %v2246 = vadd.f32 %v1556, %v2170
        %v2247 = vadd.f32 %v1557, %v2172
        %v2248 = vadd.f32 %v1558, %v2063
        %v2249 = vadd.f32 %v1559, %v2065
        %v2250 = vadd.f32 %v1560, %v2176
        %v2251 = vadd.f32 %v1561, %v2178
        %v2252 = vadd.f32 %v1562, %v2067
        %v2253 = vadd.f32 %v1563, %v2069
        %v2254 = vadd.f32 %v1564, %v2180
        %v2255 = vadd.f32 %v1565, %v2182
        %v2256 = vadd.f32 %v1566, %v2073
        %v2257 = vadd.f32 %v1567, %v2075
        %v2258 = vadd.f32 %v1568, %v2186
        %v2259 = vadd.f32 %v1569, %v2188
        %v2260 = vadd.f32 %v1570, %v2077
        %v2261 = vadd.f32 %v1571, %v2079
        %v2262 = vadd.f32 %v1572, %v2190
        %v2263 = vadd.f32 %v1573, %v2192
        %v2264 = vadd.f32 %v1574, %v2083
        %v2265 = vadd.f32 %v1575, %v2085
        %v2266 = vadd.f32 %v1576, %v2196
        %v2267 = vadd.f32 %v1577, %v2198
        %v2268 = vadd.f32 %v1578, %v2087
        %v2269 = vadd.f32 %v1579, %v2089
        %v2270 = vadd.f32 %v1580, %v2200
        %v2271 = vadd.f32 %v1581, %v2202
        %v2272 = vadd.f32 %v1582, %v2093
        %v2273 = vadd.f32 %v1583, %v2095
        %v2274 = vadd.f32 %v1584, %v2206
        %v2275 = vadd.f32 %v1585, %v2208
        %v2276 = vadd.f32 %v1586, %v2097
        %v2277 = vadd.f32 %v1587, %v2099
        %v2278 = vadd.f32 %v1588, %v2210
        %v2279 = vadd.f32 %v1589, %v2212
        %v2280 = vadd.f32 %v1590, %v2103
        %v2281 = vadd.f32 %v1591, %v2105
        %v2282 = vadd.f32 %v1592, %v2216
        %v2283 = vadd.f32 %v1593, %v2218
        %v2284 = vadd.f32 %v1594, %v2107
        %v2285 = vadd.f32 %v1595, %v2109
        %v2286 = vadd.f32 %v1596, %v2220
        %v2287 = vadd.f32 %v1597, %v2222
        %2288 = vst [vmem:[#allocation2] sm:$0xff] %v2224
        %2289 = vst [vmem:[#allocation2 + $0x8] sm:$0xff] %v2225
        %2290 = vst [vmem:[#allocation2 + $0x10] sm:$0xff] %v2226
        %2291 = vst [vmem:[#allocation2 + $0x18] sm:$0xff] %v2227
        %2292 = vst [vmem:[#allocation2 + $0x20] sm:$0xff] %v2228
        %2293 = vst [vmem:[#allocation2 + $0x28] sm:$0xff] %v2229
        %2294 = vst [vmem:[#allocation2 + $0x30] sm:$0xff] %v2230
        %2295 = vst [vmem:[#allocation2 + $0x38] sm:$0xff] %v2231
        %2296 = vst [vmem:[#allocation2 + $0x40] sm:$0xff] %v2232
        %2297 = vst [vmem:[#allocation2 + $0x48] sm:$0xff] %v2233
        %2298 = vst [vmem:[#allocation2 + $0x50] sm:$0xff] %v2234
        %2299 = vst [vmem:[#allocation2 + $0x58] sm:$0xff] %v2235
        %2300 = vst [vmem:[#allocation2 + $0x60] sm:$0xff] %v2236
        %2301 = vst [vmem:[#allocation2 + $0x68] sm:$0xff] %v2237
        %2302 = vst [vmem:[#allocation2 + $0x70] sm:$0xff] %v2238
        %2303 = vst [vmem:[#allocation2 + $0x78] sm:$0xff] %v2239
        %2304 = vst [vmem:[#allocation2 + $0x80] sm:$0xff] %v2240
        %2305 = vst [vmem:[#allocation2 + $0x88] sm:$0xff] %v2241
        %2306 = vst [vmem:[#allocation2 + $0x90] sm:$0xff] %v2242
        %2307 = vst [vmem:[#allocation2 + $0x98] sm:$0xff] %v2243
        %2308 = vst [vmem:[#allocation2 + $0xa0] sm:$0xff] %v2244
        %2309 = vst [vmem:[#allocation2 + $0xa8] sm:$0xff] %v2245
        %2310 = vst [vmem:[#allocation2 + $0xb0] sm:$0xff] %v2246
        %2311 = vst [vmem:[#allocation2 + $0xb8] sm:$0xff] %v2247
        %2312 = vst [vmem:[#allocation2 + $0xc0] sm:$0xff] %v2248
        %2313 = vst [vmem:[#allocation2 + $0xc8] sm:$0xff] %v2249
        %2314 = vst [vmem:[#allocation2 + $0xd0] sm:$0xff] %v2250
        %2315 = vst [vmem:[#allocation2 + $0xd8] sm:$0xff] %v2251
        %2316 = vst [vmem:[#allocation2 + $0xe0] sm:$0xff] %v2252
        %2317 = vst [vmem:[#allocation2 + $0xe8] sm:$0xff] %v2253
        %2318 = vst [vmem:[#allocation2 + $0xf0] sm:$0xff] %v2254
        %2319 = vst [vmem:[#allocation2 + $0xf8] sm:$0xff] %v2255
        %2320 = vst [vmem:[#allocation2 + $0x100] sm:$0xff] %v2256
        %2321 = vst [vmem:[#allocation2 + $0x108] sm:$0xff] %v2257
        %2322 = vst [vmem:[#allocation2 + $0x110] sm:$0xff] %v2258
        %2323 = vst [vmem:[#allocation2 + $0x118] sm:$0xff] %v2259
        %2324 = vst [vmem:[#allocation2 + $0x120] sm:$0xff] %v2260
        %2325 = vst [vmem:[#allocation2 + $0x128] sm:$0xff] %v2261
        %2326 = vst [vmem:[#allocation2 + $0x130] sm:$0xff] %v2262
        %2327 = vst [vmem:[#allocation2 + $0x138] sm:$0xff] %v2263
        %2328 = vst [vmem:[#allocation2 + $0x140] sm:$0xff] %v2264
        %2329 = vst [vmem:[#allocation2 + $0x148] sm:$0xff] %v2265
        %2330 = vst [vmem:[#allocation2 + $0x150] sm:$0xff] %v2266
        %2331 = vst [vmem:[#allocation2 + $0x158] sm:$0xff] %v2267
        %2332 = vst [vmem:[#allocation2 + $0x160] sm:$0xff] %v2268
        %2333 = vst [vmem:[#allocation2 + $0x168] sm:$0xff] %v2269
        %2334 = vst [vmem:[#allocation2 + $0x170] sm:$0xff] %v2270
        %2335 = vst [vmem:[#allocation2 + $0x178] sm:$0xff] %v2271
        %2336 = vst [vmem:[#allocation2 + $0x180] sm:$0xff] %v2272
        %2337 = vst [vmem:[#allocation2 + $0x188] sm:$0xff] %v2273
        %2338 = vst [vmem:[#allocation2 + $0x190] sm:$0xff] %v2274
        %2339 = vst [vmem:[#allocation2 + $0x198] sm:$0xff] %v2275
        %2340 = vst [vmem:[#allocation2 + $0x1a0] sm:$0xff] %v2276
        %2341 = vst [vmem:[#allocation2 + $0x1a8] sm:$0xff] %v2277
        %2342 = vst [vmem:[#allocation2 + $0x1b0] sm:$0xff] %v2278
        %2343 = vst [vmem:[#allocation2 + $0x1b8] sm:$0xff] %v2279
        %2344 = vst [vmem:[#allocation2 + $0x1c0] sm:$0xff] %v2280
        %2345 = vst [vmem:[#allocation2 + $0x1c8] sm:$0xff] %v2281
        %2346 = vst [vmem:[#allocation2 + $0x1d0] sm:$0xff] %v2282
        %2347 = vst [vmem:[#allocation2 + $0x1d8] sm:$0xff] %v2283
        %2348 = vst [vmem:[#allocation2 + $0x1e0] sm:$0xff] %v2284
        %2349 = vst [vmem:[#allocation2 + $0x1e8] sm:$0xff] %v2285
        %2350 = vst [vmem:[#allocation2 + $0x1f0] sm:$0xff] %v2286
        %2351 = vst [vmem:[#allocation2 + $0x1f8] sm:$0xff] %v2287
        %p2352 = scmp.eq.s32.totalorder %s21, 1
        // Predicated region
        $region83: #{feed_forward.1} parent=73 // pred_check
          %p2353 = pneg %p2352
        $region84: #{feed_forward.1} parent=73 // pred_check_branch
          %2355 = sbr.rel (%p2353) target = $region86
        $region85: #{feed_forward.1} parent=73 // pred_region
          %v2356 = vld [vmem:[#allocation2] sm:$0xff]
          %v2357 = vld [vmem:[#allocation2 + $0x8] sm:$0xff]
          %v2358 = vld [vmem:[#allocation2 + $0x10] sm:$0xff]
          %v2359 = vld [vmem:[#allocation2 + $0x18] sm:$0xff]
          %v2360 = vld [vmem:[#allocation2 + $0x20] sm:$0xff]
          %v2361 = vld [vmem:[#allocation2 + $0x28] sm:$0xff]
          %v2362 = vld [vmem:[#allocation2 + $0x30] sm:$0xff]
          %v2363 = vld [vmem:[#allocation2 + $0x38] sm:$0xff]
          %v2364 = vld [vmem:[#allocation2 + $0x40] sm:$0xff]
          %v2365 = vld [vmem:[#allocation2 + $0x48] sm:$0xff]
          %v2366 = vld [vmem:[#allocation2 + $0x50] sm:$0xff]
          %v2367 = vld [vmem:[#allocation2 + $0x58] sm:$0xff]
          %v2368 = vld [vmem:[#allocation2 + $0x60] sm:$0xff]
          %v2369 = vld [vmem:[#allocation2 + $0x68] sm:$0xff]
          %v2370 = vld [vmem:[#allocation2 + $0x70] sm:$0xff]
          %v2371 = vld [vmem:[#allocation2 + $0x78] sm:$0xff]
          %v2372 = vld [vmem:[#allocation2 + $0x80] sm:$0xff]
          %v2373 = vld [vmem:[#allocation2 + $0x88] sm:$0xff]
          %v2374 = vld [vmem:[#allocation2 + $0x90] sm:$0xff]
          %v2375 = vld [vmem:[#allocation2 + $0x98] sm:$0xff]
          %v2376 = vld [vmem:[#allocation2 + $0xa0] sm:$0xff]
          %v2377 = vld [vmem:[#allocation2 + $0xa8] sm:$0xff]
          %v2378 = vld [vmem:[#allocation2 + $0xb0] sm:$0xff]
          %v2379 = vld [vmem:[#allocation2 + $0xb8] sm:$0xff]
          %v2380 = vld [vmem:[#allocation2 + $0xc0] sm:$0xff]
          %v2381 = vld [vmem:[#allocation2 + $0xc8] sm:$0xff]
          %v2382 = vld [vmem:[#allocation2 + $0xd0] sm:$0xff]
          %v2383 = vld [vmem:[#allocation2 + $0xd8] sm:$0xff]
          %v2384 = vld [vmem:[#allocation2 + $0xe0] sm:$0xff]
          %v2385 = vld [vmem:[#allocation2 + $0xe8] sm:$0xff]
          %v2386 = vld [vmem:[#allocation2 + $0xf0] sm:$0xff]
          %v2387 = vld [vmem:[#allocation2 + $0xf8] sm:$0xff]
          %v2388 = vld [vmem:[#allocation2 + $0x100] sm:$0xff]
          %v2389 = vld [vmem:[#allocation2 + $0x108] sm:$0xff]
          %v2390 = vld [vmem:[#allocation2 + $0x110] sm:$0xff]
          %v2391 = vld [vmem:[#allocation2 + $0x118] sm:$0xff]
          %v2392 = vld [vmem:[#allocation2 + $0x120] sm:$0xff]
          %v2393 = vld [vmem:[#allocation2 + $0x128] sm:$0xff]
          %v2394 = vld [vmem:[#allocation2 + $0x130] sm:$0xff]
          %v2395 = vld [vmem:[#allocation2 + $0x138] sm:$0xff]
          %v2396 = vld [vmem:[#allocation2 + $0x140] sm:$0xff]
          %v2397 = vld [vmem:[#allocation2 + $0x148] sm:$0xff]
          %v2398 = vld [vmem:[#allocation2 + $0x150] sm:$0xff]
          %v2399 = vld [vmem:[#allocation2 + $0x158] sm:$0xff]
          %v2400 = vld [vmem:[#allocation2 + $0x160] sm:$0xff]
          %v2401 = vld [vmem:[#allocation2 + $0x168] sm:$0xff]
          %v2402 = vld [vmem:[#allocation2 + $0x170] sm:$0xff]
          %v2403 = vld [vmem:[#allocation2 + $0x178] sm:$0xff]
          %v2404 = vld [vmem:[#allocation2 + $0x180] sm:$0xff]
          %v2405 = vld [vmem:[#allocation2 + $0x188] sm:$0xff]
          %v2406 = vld [vmem:[#allocation2 + $0x190] sm:$0xff]
          %v2407 = vld [vmem:[#allocation2 + $0x198] sm:$0xff]
          %v2408 = vld [vmem:[#allocation2 + $0x1a0] sm:$0xff]
          %v2409 = vld [vmem:[#allocation2 + $0x1a8] sm:$0xff]
          %v2410 = vld [vmem:[#allocation2 + $0x1b0] sm:$0xff]
          %v2411 = vld [vmem:[#allocation2 + $0x1b8] sm:$0xff]
          %v2412 = vld [vmem:[#allocation2 + $0x1c0] sm:$0xff]
          %v2413 = vld [vmem:[#allocation2 + $0x1c8] sm:$0xff]
          %v2414 = vld [vmem:[#allocation2 + $0x1d0] sm:$0xff]
          %v2415 = vld [vmem:[#allocation2 + $0x1d8] sm:$0xff]
          %v2416 = vld [vmem:[#allocation2 + $0x1e0] sm:$0xff]
          %v2417 = vld [vmem:[#allocation2 + $0x1e8] sm:$0xff]
          %v2418 = vld [vmem:[#allocation2 + $0x1f0] sm:$0xff]
          %v2419 = vld [vmem:[#allocation2 + $0x1f8] sm:$0xff]
          %2420 = vst [vmem:[%s596] sm:$0xff] %v2356
          %2421 = vst [vmem:[%s596 + $0x8] sm:$0xff] %v2357
          %2422 = vst [vmem:[%s596 + $0x10] sm:$0xff] %v2358
          %2423 = vst [vmem:[%s596 + $0x18] sm:$0xff] %v2359
          %2424 = vst [vmem:[%s596 + $0x20] sm:$0xff] %v2360
          %2425 = vst [vmem:[%s596 + $0x28] sm:$0xff] %v2361
          %2426 = vst [vmem:[%s596 + $0x30] sm:$0xff] %v2362
          %2427 = vst [vmem:[%s596 + $0x38] sm:$0xff] %v2363
          %2428 = vst [vmem:[%s596 + $0x40] sm:$0xff] %v2364
          %2429 = vst [vmem:[%s596 + $0x48] sm:$0xff] %v2365
          %2430 = vst [vmem:[%s596 + $0x50] sm:$0xff] %v2366
          %2431 = vst [vmem:[%s596 + $0x58] sm:$0xff] %v2367
          %2432 = vst [vmem:[%s596 + $0x60] sm:$0xff] %v2368
          %2433 = vst [vmem:[%s596 + $0x68] sm:$0xff] %v2369
          %2434 = vst [vmem:[%s596 + $0x70] sm:$0xff] %v2370
          %2435 = vst [vmem:[%s596 + $0x78] sm:$0xff] %v2371
          %2436 = vst [vmem:[%s596 + $0x80] sm:$0xff] %v2372
          %2437 = vst [vmem:[%s596 + $0x88] sm:$0xff] %v2373
          %2438 = vst [vmem:[%s596 + $0x90] sm:$0xff] %v2374
          %2439 = vst [vmem:[%s596 + $0x98] sm:$0xff] %v2375
          %2440 = vst [vmem:[%s596 + $0xa0] sm:$0xff] %v2376
          %2441 = vst [vmem:[%s596 + $0xa8] sm:$0xff] %v2377
          %2442 = vst [vmem:[%s596 + $0xb0] sm:$0xff] %v2378
          %2443 = vst [vmem:[%s596 + $0xb8] sm:$0xff] %v2379
          %2444 = vst [vmem:[%s596 + $0xc0] sm:$0xff] %v2380
          %2445 = vst [vmem:[%s596 + $0xc8] sm:$0xff] %v2381
          %2446 = vst [vmem:[%s596 + $0xd0] sm:$0xff] %v2382
          %2447 = vst [vmem:[%s596 + $0xd8] sm:$0xff] %v2383
          %2448 = vst [vmem:[%s596 + $0xe0] sm:$0xff] %v2384
          %2449 = vst [vmem:[%s596 + $0xe8] sm:$0xff] %v2385
          %2450 = vst [vmem:[%s596 + $0xf0] sm:$0xff] %v2386
          %2451 = vst [vmem:[%s596 + $0xf8] sm:$0xff] %v2387
          %2452 = vst [vmem:[%s596 + $0x100] sm:$0xff] %v2388
          %2453 = vst [vmem:[%s596 + $0x108] sm:$0xff] %v2389
          %2454 = vst [vmem:[%s596 + $0x110] sm:$0xff] %v2390
          %2455 = vst [vmem:[%s596 + $0x118] sm:$0xff] %v2391
          %2456 = vst [vmem:[%s596 + $0x120] sm:$0xff] %v2392
          %2457 = vst [vmem:[%s596 + $0x128] sm:$0xff] %v2393
          %2458 = vst [vmem:[%s596 + $0x130] sm:$0xff] %v2394
          %2459 = vst [vmem:[%s596 + $0x138] sm:$0xff] %v2395
          %2460 = vst [vmem:[%s596 + $0x140] sm:$0xff] %v2396
          %2461 = vst [vmem:[%s596 + $0x148] sm:$0xff] %v2397
          %2462 = vst [vmem:[%s596 + $0x150] sm:$0xff] %v2398
          %2463 = vst [vmem:[%s596 + $0x158] sm:$0xff] %v2399
          %2464 = vst [vmem:[%s596 + $0x160] sm:$0xff] %v2400
          %2465 = vst [vmem:[%s596 + $0x168] sm:$0xff] %v2401
          %2466 = vst [vmem:[%s596 + $0x170] sm:$0xff] %v2402
          %2467 = vst [vmem:[%s596 + $0x178] sm:$0xff] %v2403
          %2468 = vst [vmem:[%s596 + $0x180] sm:$0xff] %v2404
          %2469 = vst [vmem:[%s596 + $0x188] sm:$0xff] %v2405
          %2470 = vst [vmem:[%s596 + $0x190] sm:$0xff] %v2406
          %2471 = vst [vmem:[%s596 + $0x198] sm:$0xff] %v2407
          %2472 = vst [vmem:[%s596 + $0x1a0] sm:$0xff] %v2408
          %2473 = vst [vmem:[%s596 + $0x1a8] sm:$0xff] %v2409
          %2474 = vst [vmem:[%s596 + $0x1b0] sm:$0xff] %v2410
          %2475 = vst [vmem:[%s596 + $0x1b8] sm:$0xff] %v2411
          %2476 = vst [vmem:[%s596 + $0x1c0] sm:$0xff] %v2412
          %2477 = vst [vmem:[%s596 + $0x1c8] sm:$0xff] %v2413
          %2478 = vst [vmem:[%s596 + $0x1d0] sm:$0xff] %v2414
          %2479 = vst [vmem:[%s596 + $0x1d8] sm:$0xff] %v2415
          %2480 = vst [vmem:[%s596 + $0x1e0] sm:$0xff] %v2416
          %2481 = vst [vmem:[%s596 + $0x1e8] sm:$0xff] %v2417
          %2482 = vst [vmem:[%s596 + $0x1f0] sm:$0xff] %v2418
          %2483 = vst [vmem:[%s596 + $0x1f8] sm:$0xff] %v2419
        $region86: #{feed_forward.1} parent=73 // pred_fallthru
          _
        %s2484 = smul.u32 16, %s20
        %p2485 = scmp.lt.s32.totalorder %s2484, 15
        %s2486 = scalar_select %p2485, %s2484, 15
        %s2487 = smul.addr %s2486, 4
        %s2488 = smul.addr %s2487, 8
        %s2489 = scalar_lea.vmem %s5, %s2488
        // Predicated region
        $region87: #{feed_forward.1} parent=73 // pred_check
          %p2490 = pneg %p171
        $region88: #{feed_forward.1} parent=73 // pred_check_branch
          %2492 = sbr.rel (%p2490) target = $region90
        $region89: #{feed_forward.1} parent=73 // pred_region
          %s2493 = smul.u32 16, %s20
        $region90: #{feed_forward.1} parent=73 // pred_fallthru
          _
        // Predicated region
        $region91: #{feed_forward.1} parent=73 // pred_check
          %p2494 = pneg %p171
        $region92: #{feed_forward.1} parent=73 // pred_check_branch
          %2496 = sbr.rel (%p2494) target = $region94
        $region93: #{feed_forward.1} parent=73 // pred_region
          %s2497 = smul.u32 16, %s20
          %p2498 = scmp.lt.s32.totalorder %s2497, 15
          %s2499 = scalar_select %p2498, %s2497, 15
          %s2500 = smul.addr %s2499, 4
          %s2501 = smul.addr %s2500, 8
          %s2502 = scalar_lea.vmem %s5, %s2501
        $region94: #{feed_forward.1} parent=73 // pred_fallthru
          _
      $region74: #{feed_forward.1} parent=5 // pred_fallthru
        _
      %p2503 = scmp.le.s32.totalorder 2, %s11
      // Predicated region
      $region95: #{feed_forward.1} parent=5 // pred_check
        %p2504 = pneg %p2503
      $region96: #{feed_forward.1} parent=5 // pred_check_branch
        %2506 = sbr.rel (%p2504) target = $region98
      $region97: #{feed_forward.1} parent=5 // pred_region
        %s2507 = ssub.s32 %s11, 2
      $region98: #{feed_forward.1} parent=5 // pred_fallthru
        _
    $region6: #{feed_forward.1} parent=1 // loop_footer
      %s15 = sadd.s32 1, %s11
    $region7: #{feed_forward.1} parent=1 // loop_footer_branch
      %10 = sbr.rel target = $region3
    $region8: #{feed_forward.1} parent=1 // loop_exit
      _

</llo_original>
